<compile_context>
chip_gen: v6e
topology: v6e:2x2x1
jax: 0.10.0
libtpu: 0.0.40
codegen_flags: <defaults>
</compile_context>

<pallas_src>
import jax
import jax.numpy as jnp
from jax import lax
from jax.experimental import pallas as pl
from jax.experimental.pallas import tpu as pltpu


# ----------------------------- helpers --------------------------------------

def _round_up(x, m):
    return ((x + m - 1) // m) * m


def _largest_divisor_leq(n, cap):
    cap = max(1, min(n, cap))
    for d in range(cap, 0, -1):
        if n % d == 0:
            return d
    return 1


# ----------------------------- kernel ---------------------------------------

def rnn_net_kernel(x_seq_ref, x_ar_ref,
                   wih_ref, whh_ref, bgi_ref, bhhn_ref,
                   wtail_ref, btail_ref,
                   out_ref,
                   h_ref, gi_ref):
    tb, bt, in_dim = x_seq_ref.shape          # time-block, batch-tile, input_dim
    hid_p = whh_ref.shape[0]                  # padded hidden (multiple of 128)

    t_idx = pl.program_id(1)
    n_t = pl.num_programs(1)

    # Reset the carried hidden state at the first time-block of each batch tile.
    @pl.when(t_idx == 0)
    def _():
        h_ref[...] = jnp.zeros_like(h_ref)

    # --- hoisted input-side matmul: one big MXU call for the whole time-block.
    # (TB, bt, I) -> (TB*bt, I) is layout-preserving because bt % 8 == 0.
    x2 = x_seq_ref[...].reshape(tb * bt, in_dim)
    gi = jnp.dot(x2, wih_ref[...], preferred_element_type=jnp.float32)
    gi = gi + bgi_ref[...]                    # r/z biases (ih+hh) + n bias (ih) pre-folded
    gi_ref[...] = gi.reshape(tb, bt, 3 * hid_p)

    whh = whh_ref[...]
    md = whh.dtype
    bhh_n = jnp.broadcast_to(bhhn_ref[...], (bt, hid_p))   # hoisted broadcast

    # --- serial recurrence: only the h-path matmul + gate math per step.
    def gru_step(t, h):
        gi_t = gi_ref[t]                                   # (bt, 3*hid_p), lane-aligned slabs
        gh = jnp.dot(h.astype(md), whh, preferred_element_type=jnp.float32)
        r = jax.nn.sigmoid(gi_t[:, :hid_p] + gh[:, :hid_p])
        z = jax.nn.sigmoid(gi_t[:, hid_p:2 * hid_p] + gh[:, hid_p:2 * hid_p])
        n = jnp.tanh(gi_t[:, 2 * hid_p:] + r * (gh[:, 2 * hid_p:] + bhh_n))
        return (1.0 - z) * n + z * h

    unroll = True if tb <= 16 else 8
    h_ref[...] = lax.fori_loop(0, tb, gru_step, h_ref[...], unroll=unroll)

    # --- fused tail (only on the last time-block of this batch tile):
    #     out = [h_final | x_ar] @ [Wlin ; War] + (blin + bar), lane-dense store.
    @pl.when(t_idx == n_t - 1)
    def _():
        wt = wtail_ref[...]
        feat = jnp.concatenate(
            [h_ref[...].astype(wt.dtype), x_ar_ref[...].astype(wt.dtype)], axis=1)
        out = jnp.dot(feat, wt, preferred_element_type=jnp.float32) + btail_ref[...]
        out_ref[...] = out.astype(out_ref.dtype)


# ----------------------------- wrapper ---------------------------------------

def _prepare_kernel_params(p, hid, hid_p, out_dim, out_p, seq_len, input_dim,
                           matmul_dtype):
    """Layout glue only: transpose / pad PyTorch-shaped weights into the
    lane-aligned, gate-slab layout the kernel expects. Padding is zeros, so
    padded hidden/output lanes never leak into real outputs."""
    w_ih, w_hh = p["w_ih"], p["w_hh"]           # (3H, I), (3H, H)
    b_ih, b_hh = p["b_ih"], p["b_hh"]           # (3H,),  (3H,)

    wih_k = jnp.zeros((input_dim, 3 * hid_p), jnp.float32)
    whh_k = jnp.zeros((hid_p, 3 * hid_p), jnp.float32)
    b_gi = jnp.zeros((1, 3 * hid_p), jnp.float32)
    bhh_n = jnp.zeros((1, hid_p), jnp.float32)
    for g in range(3):                           # gate order: r, z, n
        wih_k = wih_k.at[:, g * hid_p:g * hid_p + hid].set(
            w_ih[g * hid:(g + 1) * hid, :].T)
        whh_k = whh_k.at[:hid, g * hid_p:g * hid_p + hid].set(
            w_hh[g * hid:(g + 1) * hid, :].T)
        bias = b_ih[g * hid:(g + 1) * hid]
        if g < 2:                                # fold hh bias for r, z only
            bias = bias + b_hh[g * hid:(g + 1) * hid]
        b_gi = b_gi.at[0, g * hid_p:g * hid_p + hid].set(bias)
    bhh_n = bhh_n.at[0, :hid].set(b_hh[2 * hid:3 * hid])   # stays separate (× r)

    w_tail = jnp.zeros((hid_p + seq_len, out_p), jnp.float32)
    w_tail = w_tail.at[:hid, :out_dim].set(p["w_lin"].T)
    w_tail = w_tail.at[hid_p:hid_p + seq_len, :out_dim].set(p["w_ar"].T)
    b_tail = jnp.zeros((1, out_p), jnp.float32)
    b_tail = b_tail.at[0, :out_dim].set(p["b_lin"] + p["b_ar"])

    return (wih_k.astype(matmul_dtype), whh_k.astype(matmul_dtype),
            b_gi, bhh_n, w_tail.astype(matmul_dtype), b_tail)


def rnn_net_forward(x, params, *, matmul_dtype=jnp.float32):
    """x: (batch, seq_len, input_dim) float32 -> (batch, output_dim) float32.
    On v6e / v7x pass matmul_dtype=jnp.bfloat16 (f32 accumulation is kept)."""
    batch, seq_len, input_dim = x.shape
    hid = params["w_hh"].shape[1]
    out_dim = params["w_lin"].shape[0]

    hid_p = _round_up(hid, 128)                 # lane-aligned gate slabs
    out_p = _round_up(out_dim, 128)             # lane-dense output store
    bt = min(128, _round_up(batch, 8))          # batch tile (sublane multiple)
    batch_pad = _round_up(batch, bt)

    # Time-block: largest divisor of seq_len that keeps the GI scratch <= ~4 MiB.
    gi_row_bytes = bt * 3 * hid_p * 4
    max_tb = max(1, (4 * 1024 * 1024) // gi_row_bytes)
    tb_time = _largest_divisor_leq(seq_len, min(128, max_tb))

    # Layout glue (no compute): time-major x for the recurrence, AR input.
    x_seq = jnp.transpose(x, (1, 0, 2))                         # (S, B, I)
    x_seq = jnp.pad(x_seq, ((0, 0), (0, batch_pad - batch), (0, 0)))
    x_ar = jnp.pad(x[:, :, 0], ((0, batch_pad - batch), (0, 0)))  # (Bp, S)

    wih_k, whh_k, b_gi, bhh_n, w_tail, b_tail = _prepare_kernel_params(
        params, hid, hid_p, out_dim, out_p, seq_len, input_dim, matmul_dtype)
    x_seq = x_seq.astype(matmul_dtype)
    x_ar = x_ar.astype(matmul_dtype)

    grid = (batch_pad // bt, seq_len // tb_time)

    out_padded = pl.pallas_call(
        rnn_net_kernel,
        out_shape=jax.ShapeDtypeStruct((batch_pad, out_p), jnp.float32),
        grid_spec=pltpu.PrefetchScalarGridSpec(
            num_scalar_prefetch=0,
            grid=grid,
            in_specs=[
                # streamed in time-blocks (double-buffered by the pipeline)
                pl.BlockSpec((tb_time, bt, input_dim), lambda b, t: (t, b, 0)),
                # per-batch-tile AR input, resident across the time axis
                pl.BlockSpec((bt, seq_len), lambda b, t: (b, 0)),
                # weights: full arrays, constant block index -> copied once
                pl.BlockSpec((input_dim, 3 * hid_p), lambda b, t: (0, 0)),
                pl.BlockSpec((hid_p, 3 * hid_p), lambda b, t: (0, 0)),
                pl.BlockSpec((1, 3 * hid_p), lambda b, t: (0, 0)),
                pl.BlockSpec((1, hid_p), lambda b, t: (0, 0)),
                pl.BlockSpec((hid_p + seq_len, out_p), lambda b, t: (0, 0)),
                pl.BlockSpec((1, out_p), lambda b, t: (0, 0)),
            ],
            out_specs=pl.BlockSpec((bt, out_p), lambda b, t: (b, 0)),
            scratch_shapes=[
                pltpu.VMEM((bt, hid_p), jnp.float32),              # carried h
                pltpu.VMEM((tb_time, bt, 3 * hid_p), jnp.float32), # GI block
            ],
        ),
        compiler_params=pltpu.CompilerParams(
            # batch tiles are independent -> parallel (2 TCs on v7x);
            # time is the serial recurrence -> arbitrary.
            dimension_semantics=("parallel", "arbitrary"),
            vmem_limit_bytes=32 * 1024 * 1024,
        ),
    )(x_seq, x_ar, wih_k, whh_k, b_gi, bhh_n, w_tail, b_tail)

    return out_padded[:batch, :out_dim]


# ------------------------ params & pure-JAX reference ------------------------

def init_params(key, input_dim, hid_dim, output_dim, seq_len):
    """PyTorch-shaped parameters (nn.GRU / nn.Linear layout)."""
    ks = jax.random.split(key, 8)
    u = lambda k, shape, s: jax.random.uniform(k, shape, jnp.float32, -s, s)
    s_gru = 1.0 / float(hid_dim) ** 0.5
    s_lin = 1.0 / float(hid_dim) ** 0.5
    s_ar = 1.0 / float(seq_len) ** 0.5
    return {
        "w_ih": u(ks[0], (3 * hid_dim, input_dim), s_gru),
        "w_hh": u(ks[1], (3 * hid_dim, hid_dim), s_gru),
        "b_ih": u(ks[2], (3 * hid_dim,), s_gru),
        "b_hh": u(ks[3], (3 * hid_dim,), s_gru),
        "w_lin": u(ks[4], (output_dim, hid_dim), s_lin),
        "b_lin": u(ks[5], (output_dim,), s_lin),
        "w_ar": u(ks[6], (output_dim, seq_len), s_ar),
        "b_ar": u(ks[7], (output_dim,), s_ar),
    }


def rnn_net_reference(x, p):
    """Pure-JAX replica of the PyTorch forward (GRU gate order r, z, n)."""
    batch, seq_len, _ = x.shape
    hid = p["w_hh"].shape[1]
    h = jnp.zeros((batch, hid), jnp.float32)
    for t in range(seq_len):
        x_t = x[:, t, :]
        gi = x_t @ p["w_ih"].T + p["b_ih"]
        gh = h @ p["w_hh"].T + p["b_hh"]
        i_r, i_z, i_n = jnp.split(gi, 3, axis=1)
        h_r, h_z, h_n = jnp.split(gh, 3, axis=1)
        r = jax.nn.sigmoid(i_r + h_r)
        z = jax.nn.sigmoid(i_z + h_z)
        n = jnp.tanh(i_n + r * h_n)
        h = (1.0 - z) * n + z * h
    out = h @ p["w_lin"].T + p["b_lin"]
    ar = x[:, :, 0] @ p["w_ar"].T + p["b_ar"]
    return out + ar


# --------------------------------- main --------------------------------------

if __name__ == "__main__":
    batch, seq_len, input_dim = 2, 8, 4
    hid_dim, output_dim = 32, 4

    key = jax.random.PRNGKey(0)
    kx, kp = jax.random.split(key)
    x = jax.random.normal(kx, (batch, seq_len, input_dim), jnp.float32)
    params = init_params(kp, input_dim, hid_dim, output_dim, seq_len)

    # f32 matmuls here for tight tolerance; use matmul_dtype=jnp.bfloat16 on v6e/v7x.
    out = jax.block_until_ready(rnn_net_forward(x, params))
    ref = rnn_net_reference(x, params)

    assert out.shape == (batch, output_dim)
    assert jnp.allclose(out, ref, rtol=1e-3, atol=1e-3), (out, ref)
    print("KERNEL_OK")
</pallas_src>

<mosaic_0001>
module attributes {stable_mosaic.version = 11 : i64} {
  func.func @rnn_net_kernel(%arg0: i32, %arg1: i32, %arg2: memref<8x8x4xf32, #tpu.memory_space<vmem>>, %arg3: memref<8x8xf32, #tpu.memory_space<vmem>>, %arg4: memref<4x384xf32, #tpu.memory_space<vmem>>, %arg5: memref<128x384xf32, #tpu.memory_space<vmem>>, %arg6: memref<1x384xf32, #tpu.memory_space<vmem>>, %arg7: memref<1x128xf32, #tpu.memory_space<vmem>>, %arg8: memref<136x128xf32, #tpu.memory_space<vmem>>, %arg9: memref<1x128xf32, #tpu.memory_space<vmem>>, %arg10: memref<8x128xf32, #tpu.memory_space<vmem>>, %arg11: memref<8x128xf32, #tpu.memory_space<vmem>>, %arg12: memref<8x8x384xf32, #tpu.memory_space<vmem>>) attributes {dimension_semantics = [#tpu.dimension_semantics<parallel>, #tpu.dimension_semantics<arbitrary>], iteration_bounds = array<i64: 1, 1>, scalar_prefetch = 0 : i64, scratch_operands = 2 : i64, tpu.core_type = #tpu.core_type<tc>, window_params = [{transform_indices = @transform_0, window_bounds = array<i64: 8, 8, 4>}, {transform_indices = @transform_1, window_bounds = array<i64: 8, 8>}, {pipeline_mode = #tpu.pipeline_mode<synchronous>, transform_indices = @transform_2, window_bounds = array<i64: 4, 384>}, {pipeline_mode = #tpu.pipeline_mode<synchronous>, transform_indices = @transform_3, window_bounds = array<i64: 128, 384>}, {pipeline_mode = #tpu.pipeline_mode<synchronous>, transform_indices = @transform_4, window_bounds = array<i64: 1, 384>}, {pipeline_mode = #tpu.pipeline_mode<synchronous>, transform_indices = @transform_5, window_bounds = array<i64: 1, 128>}, {pipeline_mode = #tpu.pipeline_mode<synchronous>, transform_indices = @transform_6, window_bounds = array<i64: 136, 128>}, {pipeline_mode = #tpu.pipeline_mode<synchronous>, transform_indices = @transform_7, window_bounds = array<i64: 1, 128>}, {transform_indices = @transform_8, window_bounds = array<i64: 8, 128>}]} {
    %c0_i32 = arith.constant 0 : i32
    %0 = arith.cmpi eq, %arg1, %c0_i32 : i32
    %1 = arith.extui %0 : i1 to i32
    %c0_i32_0 = arith.constant 0 : i32
    %2 = arith.cmpi ne, %1, %c0_i32_0 : i32
    scf.if %2 {
      %cst_69 = arith.constant 0.000000e+00 : f32
      %269 = vector.broadcast %cst_69 : f32 to vector<8x128xf32>
      %c0_70 = arith.constant 0 : index
      %c0_71 = arith.constant 0 : index
      %270 = vector.load %arg11[%c0_70, %c0_71] : memref<8x128xf32, #tpu.memory_space<vmem>>, vector<8x128xf32>
      tpu.vector_store %arg11[%c0_70, %c0_71], %269 {strides = array<i32>} : memref<8x128xf32, #tpu.memory_space<vmem>>, vector<8x128xf32>,
    } else {
    }
    %c0 = arith.constant 0 : index
    %c0_1 = arith.constant 0 : index
    %c0_2 = arith.constant 0 : index
    %3 = vector.load %arg2[%c0, %c0_1, %c0_2] : memref<8x8x4xf32, #tpu.memory_space<vmem>>, vector<8x8x4xf32>
    %4 = vector.shape_cast %3 : vector<8x8x4xf32> to vector<64x4xf32>
    %c0_3 = arith.constant 0 : index
    %c0_4 = arith.constant 0 : index
    %5 = vector.load %arg4[%c0_3, %c0_4] : memref<4x384xf32, #tpu.memory_space<vmem>>, vector<4x384xf32>
    %cst = arith.constant dense<0.000000e+00> : vector<64x384xf32>
    %6 = tpu.matmul %4, %5, %cst {dimension_numbers = #tpu.dot_dimension_numbers<[1], [0], [0], [1], [0, 0, 1, 1], [], []>} : vector<64x4xf32>, vector<4x384xf32>, vector<64x384xf32> -> vector<64x384xf32>
    %c0_5 = arith.constant 0 : index
    %c0_6 = arith.constant 0 : index
    %7 = vector.load %arg6[%c0_5, %c0_6] : memref<1x384xf32, #tpu.memory_space<vmem>>, vector<1x384xf32>
    %8 = vector.broadcast %7 : vector<1x384xf32> to vector<64x384xf32>
    %9 = arith.addf %6, %8 : vector<64x384xf32>
    %10 = vector.shape_cast %9 : vector<64x384xf32> to vector<8x8x384xf32>
    %c0_7 = arith.constant 0 : index
    %c0_8 = arith.constant 0 : index
    %c0_9 = arith.constant 0 : index
    %11 = vector.load %arg12[%c0_7, %c0_8, %c0_9] : memref<8x8x384xf32, #tpu.memory_space<vmem>>, vector<8x8x384xf32>
    tpu.vector_store %arg12[%c0_7, %c0_8, %c0_9], %10 {strides = array<i32>} : memref<8x8x384xf32, #tpu.memory_space<vmem>>, vector<8x8x384xf32>,
    %c0_10 = arith.constant 0 : index
    %c0_11 = arith.constant 0 : index
    %12 = vector.load %arg5[%c0_10, %c0_11] : memref<128x384xf32, #tpu.memory_space<vmem>>, vector<128x384xf32>
    %c0_12 = arith.constant 0 : index
    %c0_13 = arith.constant 0 : index
    %13 = vector.load %arg7[%c0_12, %c0_13] : memref<1x128xf32, #tpu.memory_space<vmem>>, vector<1x128xf32>
    %14 = vector.shape_cast %13 : vector<1x128xf32> to vector<1x128xf32>
    %15 = vector.broadcast %14 : vector<1x128xf32> to vector<8x128xf32>
    %c0_14 = arith.constant 0 : index
    %c0_15 = arith.constant 0 : index
    %16 = vector.load %arg11[%c0_14, %c0_15] : memref<8x128xf32, #tpu.memory_space<vmem>>, vector<8x128xf32>
    %c0_i32_16 = arith.constant 0 : i32
    %17 = arith.index_cast %c0_i32_16 : i32 to index
    %c0_17 = arith.constant 0 : index
    %c0_18 = arith.constant 0 : index
    %18 = vector.load %arg12[%17, %c0_17, %c0_18] : memref<8x8x384xf32, #tpu.memory_space<vmem>>, vector<1x8x384xf32>
    %19 = vector.shape_cast %18 : vector<1x8x384xf32> to vector<8x384xf32>
    %cst_19 = arith.constant dense<0.000000e+00> : vector<8x384xf32>
    %20 = tpu.matmul %16, %12, %cst_19 {dimension_numbers = #tpu.dot_dimension_numbers<[1], [0], [0], [1], [0, 0, 1, 1], [], []>} : vector<8x128xf32>, vector<128x384xf32>, vector<8x384xf32> -> vector<8x384xf32>
    %21 = vector.extract_strided_slice %19 {offsets = [0, 0], sizes = [8, 128], strides = [1, 1]} : vector<8x384xf32> to vector<8x128xf32>
    %22 = vector.extract_strided_slice %20 {offsets = [0, 0], sizes = [8, 128], strides = [1, 1]} : vector<8x384xf32> to vector<8x128xf32>
    %23 = arith.addf %21, %22 : vector<8x128xf32>
    %24 = arith.negf %23 : vector<8x128xf32>
    %25 = math.exp %24 : vector<8x128xf32>
    %cst_20 = arith.constant 1.000000e+00 : f32
    %26 = vector.broadcast %cst_20 : f32 to vector<8x128xf32>
    %27 = arith.addf %26, %25 : vector<8x128xf32>
    %28 = arith.divf %26, %27 : vector<8x128xf32>
    %29 = vector.extract_strided_slice %19 {offsets = [0, 128], sizes = [8, 128], strides = [1, 1]} : vector<8x384xf32> to vector<8x128xf32>
    %30 = vector.extract_strided_slice %20 {offsets = [0, 128], sizes = [8, 128], strides = [1, 1]} : vector<8x384xf32> to vector<8x128xf32>
    %31 = arith.addf %29, %30 : vector<8x128xf32>
    %32 = arith.negf %31 : vector<8x128xf32>
    %33 = math.exp %32 : vector<8x128xf32>
    %cst_21 = arith.constant 1.000000e+00 : f32
    %34 = vector.broadcast %cst_21 : f32 to vector<8x128xf32>
    %35 = arith.addf %34, %33 : vector<8x128xf32>
    %36 = arith.divf %34, %35 : vector<8x128xf32>
    %37 = vector.extract_strided_slice %19 {offsets = [0, 256], sizes = [8, 128], strides = [1, 1]} : vector<8x384xf32> to vector<8x128xf32>
    %38 = vector.extract_strided_slice %20 {offsets = [0, 256], sizes = [8, 128], strides = [1, 1]} : vector<8x384xf32> to vector<8x128xf32>
    %39 = arith.addf %38, %15 : vector<8x128xf32>
    %40 = arith.mulf %28, %39 : vector<8x128xf32>
    %41 = arith.addf %37, %40 : vector<8x128xf32>
    %42 = math.tanh %41 : vector<8x128xf32>
    %cst_22 = arith.constant 1.000000e+00 : f32
    %43 = vector.broadcast %cst_22 : f32 to vector<8x128xf32>
    %44 = arith.subf %43, %36 : vector<8x128xf32>
    %45 = arith.mulf %44, %42 : vector<8x128xf32>
    %46 = arith.mulf %36, %16 : vector<8x128xf32>
    %47 = arith.addf %45, %46 : vector<8x128xf32>
    %c1_i32 = arith.constant 1 : i32
    %48 = arith.index_cast %c1_i32 : i32 to index
    %c0_23 = arith.constant 0 : index
    %c0_24 = arith.constant 0 : index
    %49 = vector.load %arg12[%48, %c0_23, %c0_24] : memref<8x8x384xf32, #tpu.memory_space<vmem>>, vector<1x8x384xf32>
    %50 = vector.shape_cast %49 : vector<1x8x384xf32> to vector<8x384xf32>
    %cst_25 = arith.constant dense<0.000000e+00> : vector<8x384xf32>
    %51 = tpu.matmul %47, %12, %cst_25 {dimension_numbers = #tpu.dot_dimension_numbers<[1], [0], [0], [1], [0, 0, 1, 1], [], []>} : vector<8x128xf32>, vector<128x384xf32>, vector<8x384xf32> -> vector<8x384xf32>
    %52 = vector.extract_strided_slice %50 {offsets = [0, 0], sizes = [8, 128], strides = [1, 1]} : vector<8x384xf32> to vector<8x128xf32>
    %53 = vector.extract_strided_slice %51 {offsets = [0, 0], sizes = [8, 128], strides = [1, 1]} : vector<8x384xf32> to vector<8x128xf32>
    %54 = arith.addf %52, %53 : vector<8x128xf32>
    %55 = arith.negf %54 : vector<8x128xf32>
    %56 = math.exp %55 : vector<8x128xf32>
    %cst_26 = arith.constant 1.000000e+00 : f32
    %57 = vector.broadcast %cst_26 : f32 to vector<8x128xf32>
    %58 = arith.addf %57, %56 : vector<8x128xf32>
    %59 = arith.divf %57, %58 : vector<8x128xf32>
    %60 = vector.extract_strided_slice %50 {offsets = [0, 128], sizes = [8, 128], strides = [1, 1]} : vector<8x384xf32> to vector<8x128xf32>
    %61 = vector.extract_strided_slice %51 {offsets = [0, 128], sizes = [8, 128], strides = [1, 1]} : vector<8x384xf32> to vector<8x128xf32>
    %62 = arith.addf %60, %61 : vector<8x128xf32>
    %63 = arith.negf %62 : vector<8x128xf32>
    %64 = math.exp %63 : vector<8x128xf32>
    %cst_27 = arith.constant 1.000000e+00 : f32
    %65 = vector.broadcast %cst_27 : f32 to vector<8x128xf32>
    %66 = arith.addf %65, %64 : vector<8x128xf32>
    %67 = arith.divf %65, %66 : vector<8x128xf32>
    %68 = vector.extract_strided_slice %50 {offsets = [0, 256], sizes = [8, 128], strides = [1, 1]} : vector<8x384xf32> to vector<8x128xf32>
    %69 = vector.extract_strided_slice %51 {offsets = [0, 256], sizes = [8, 128], strides = [1, 1]} : vector<8x384xf32> to vector<8x128xf32>
    %70 = arith.addf %69, %15 : vector<8x128xf32>
    %71 = arith.mulf %59, %70 : vector<8x128xf32>
    %72 = arith.addf %68, %71 : vector<8x128xf32>
    %73 = math.tanh %72 : vector<8x128xf32>
    %cst_28 = arith.constant 1.000000e+00 : f32
    %74 = vector.broadcast %cst_28 : f32 to vector<8x128xf32>
    %75 = arith.subf %74, %67 : vector<8x128xf32>
    %76 = arith.mulf %75, %73 : vector<8x128xf32>
    %77 = arith.mulf %67, %47 : vector<8x128xf32>
    %78 = arith.addf %76, %77 : vector<8x128xf32>
    %c2_i32 = arith.constant 2 : i32
    %79 = arith.index_cast %c2_i32 : i32 to index
    %c0_29 = arith.constant 0 : index
    %c0_30 = arith.constant 0 : index
    %80 = vector.load %arg12[%79, %c0_29, %c0_30] : memref<8x8x384xf32, #tpu.memory_space<vmem>>, vector<1x8x384xf32>
    %81 = vector.shape_cast %80 : vector<1x8x384xf32> to vector<8x384xf32>
    %cst_31 = arith.constant dense<0.000000e+00> : vector<8x384xf32>
    %82 = tpu.matmul %78, %12, %cst_31 {dimension_numbers = #tpu.dot_dimension_numbers<[1], [0], [0], [1], [0, 0, 1, 1], [], []>} : vector<8x128xf32>, vector<128x384xf32>, vector<8x384xf32> -> vector<8x384xf32>
    %83 = vector.extract_strided_slice %81 {offsets = [0, 0], sizes = [8, 128], strides = [1, 1]} : vector<8x384xf32> to vector<8x128xf32>
    %84 = vector.extract_strided_slice %82 {offsets = [0, 0], sizes = [8, 128], strides = [1, 1]} : vector<8x384xf32> to vector<8x128xf32>
    %85 = arith.addf %83, %84 : vector<8x128xf32>
    %86 = arith.negf %85 : vector<8x128xf32>
    %87 = math.exp %86 : vector<8x128xf32>
    %cst_32 = arith.constant 1.000000e+00 : f32
    %88 = vector.broadcast %cst_32 : f32 to vector<8x128xf32>
    %89 = arith.addf %88, %87 : vector<8x128xf32>
    %90 = arith.divf %88, %89 : vector<8x128xf32>
    %91 = vector.extract_strided_slice %81 {offsets = [0, 128], sizes = [8, 128], strides = [1, 1]} : vector<8x384xf32> to vector<8x128xf32>
    %92 = vector.extract_strided_slice %82 {offsets = [0, 128], sizes = [8, 128], strides = [1, 1]} : vector<8x384xf32> to vector<8x128xf32>
    %93 = arith.addf %91, %92 : vector<8x128xf32>
    %94 = arith.negf %93 : vector<8x128xf32>
    %95 = math.exp %94 : vector<8x128xf32>
    %cst_33 = arith.constant 1.000000e+00 : f32
    %96 = vector.broadcast %cst_33 : f32 to vector<8x128xf32>
    %97 = arith.addf %96, %95 : vector<8x128xf32>
    %98 = arith.divf %96, %97 : vector<8x128xf32>
    %99 = vector.extract_strided_slice %81 {offsets = [0, 256], sizes = [8, 128], strides = [1, 1]} : vector<8x384xf32> to vector<8x128xf32>
    %100 = vector.extract_strided_slice %82 {offsets = [0, 256], sizes = [8, 128], strides = [1, 1]} : vector<8x384xf32> to vector<8x128xf32>
    %101 = arith.addf %100, %15 : vector<8x128xf32>
    %102 = arith.mulf %90, %101 : vector<8x128xf32>
    %103 = arith.addf %99, %102 : vector<8x128xf32>
    %104 = math.tanh %103 : vector<8x128xf32>
    %cst_34 = arith.constant 1.000000e+00 : f32
    %105 = vector.broadcast %cst_34 : f32 to vector<8x128xf32>
    %106 = arith.subf %105, %98 : vector<8x128xf32>
    %107 = arith.mulf %106, %104 : vector<8x128xf32>
    %108 = arith.mulf %98, %78 : vector<8x128xf32>
    %109 = arith.addf %107, %108 : vector<8x128xf32>
    %c3_i32 = arith.constant 3 : i32
    %110 = arith.index_cast %c3_i32 : i32 to index
    %c0_35 = arith.constant 0 : index
    %c0_36 = arith.constant 0 : index
    %111 = vector.load %arg12[%110, %c0_35, %c0_36] : memref<8x8x384xf32, #tpu.memory_space<vmem>>, vector<1x8x384xf32>
    %112 = vector.shape_cast %111 : vector<1x8x384xf32> to vector<8x384xf32>
    %cst_37 = arith.constant dense<0.000000e+00> : vector<8x384xf32>
    %113 = tpu.matmul %109, %12, %cst_37 {dimension_numbers = #tpu.dot_dimension_numbers<[1], [0], [0], [1], [0, 0, 1, 1], [], []>} : vector<8x128xf32>, vector<128x384xf32>, vector<8x384xf32> -> vector<8x384xf32>
    %114 = vector.extract_strided_slice %112 {offsets = [0, 0], sizes = [8, 128], strides = [1, 1]} : vector<8x384xf32> to vector<8x128xf32>
    %115 = vector.extract_strided_slice %113 {offsets = [0, 0], sizes = [8, 128], strides = [1, 1]} : vector<8x384xf32> to vector<8x128xf32>
    %116 = arith.addf %114, %115 : vector<8x128xf32>
    %117 = arith.negf %116 : vector<8x128xf32>
    %118 = math.exp %117 : vector<8x128xf32>
    %cst_38 = arith.constant 1.000000e+00 : f32
    %119 = vector.broadcast %cst_38 : f32 to vector<8x128xf32>
    %120 = arith.addf %119, %118 : vector<8x128xf32>
    %121 = arith.divf %119, %120 : vector<8x128xf32>
    %122 = vector.extract_strided_slice %112 {offsets = [0, 128], sizes = [8, 128], strides = [1, 1]} : vector<8x384xf32> to vector<8x128xf32>
    %123 = vector.extract_strided_slice %113 {offsets = [0, 128], sizes = [8, 128], strides = [1, 1]} : vector<8x384xf32> to vector<8x128xf32>
    %124 = arith.addf %122, %123 : vector<8x128xf32>
    %125 = arith.negf %124 : vector<8x128xf32>
    %126 = math.exp %125 : vector<8x128xf32>
    %cst_39 = arith.constant 1.000000e+00 : f32
    %127 = vector.broadcast %cst_39 : f32 to vector<8x128xf32>
    %128 = arith.addf %127, %126 : vector<8x128xf32>
    %129 = arith.divf %127, %128 : vector<8x128xf32>
    %130 = vector.extract_strided_slice %112 {offsets = [0, 256], sizes = [8, 128], strides = [1, 1]} : vector<8x384xf32> to vector<8x128xf32>
    %131 = vector.extract_strided_slice %113 {offsets = [0, 256], sizes = [8, 128], strides = [1, 1]} : vector<8x384xf32> to vector<8x128xf32>
    %132 = arith.addf %131, %15 : vector<8x128xf32>
    %133 = arith.mulf %121, %132 : vector<8x128xf32>
    %134 = arith.addf %130, %133 : vector<8x128xf32>
    %135 = math.tanh %134 : vector<8x128xf32>
    %cst_40 = arith.constant 1.000000e+00 : f32
    %136 = vector.broadcast %cst_40 : f32 to vector<8x128xf32>
    %137 = arith.subf %136, %129 : vector<8x128xf32>
    %138 = arith.mulf %137, %135 : vector<8x128xf32>
    %139 = arith.mulf %129, %109 : vector<8x128xf32>
    %140 = arith.addf %138, %139 : vector<8x128xf32>
    %c4_i32 = arith.constant 4 : i32
    %141 = arith.index_cast %c4_i32 : i32 to index
    %c0_41 = arith.constant 0 : index
    %c0_42 = arith.constant 0 : index
    %142 = vector.load %arg12[%141, %c0_41, %c0_42] : memref<8x8x384xf32, #tpu.memory_space<vmem>>, vector<1x8x384xf32>
    %143 = vector.shape_cast %142 : vector<1x8x384xf32> to vector<8x384xf32>
    %cst_43 = arith.constant dense<0.000000e+00> : vector<8x384xf32>
    %144 = tpu.matmul %140, %12, %cst_43 {dimension_numbers = #tpu.dot_dimension_numbers<[1], [0], [0], [1], [0, 0, 1, 1], [], []>} : vector<8x128xf32>, vector<128x384xf32>, vector<8x384xf32> -> vector<8x384xf32>
    %145 = vector.extract_strided_slice %143 {offsets = [0, 0], sizes = [8, 128], strides = [1, 1]} : vector<8x384xf32> to vector<8x128xf32>
    %146 = vector.extract_strided_slice %144 {offsets = [0, 0], sizes = [8, 128], strides = [1, 1]} : vector<8x384xf32> to vector<8x128xf32>
    %147 = arith.addf %145, %146 : vector<8x128xf32>
    %148 = arith.negf %147 : vector<8x128xf32>
    %149 = math.exp %148 : vector<8x128xf32>
    %cst_44 = arith.constant 1.000000e+00 : f32
    %150 = vector.broadcast %cst_44 : f32 to vector<8x128xf32>
    %151 = arith.addf %150, %149 : vector<8x128xf32>
    %152 = arith.divf %150, %151 : vector<8x128xf32>
    %153 = vector.extract_strided_slice %143 {offsets = [0, 128], sizes = [8, 128], strides = [1, 1]} : vector<8x384xf32> to vector<8x128xf32>
    %154 = vector.extract_strided_slice %144 {offsets = [0, 128], sizes = [8, 128], strides = [1, 1]} : vector<8x384xf32> to vector<8x128xf32>
    %155 = arith.addf %153, %154 : vector<8x128xf32>
    %156 = arith.negf %155 : vector<8x128xf32>
    %157 = math.exp %156 : vector<8x128xf32>
    %cst_45 = arith.constant 1.000000e+00 : f32
    %158 = vector.broadcast %cst_45 : f32 to vector<8x128xf32>
    %159 = arith.addf %158, %157 : vector<8x128xf32>
    %160 = arith.divf %158, %159 : vector<8x128xf32>
    %161 = vector.extract_strided_slice %143 {offsets = [0, 256], sizes = [8, 128], strides = [1, 1]} : vector<8x384xf32> to vector<8x128xf32>
    %162 = vector.extract_strided_slice %144 {offsets = [0, 256], sizes = [8, 128], strides = [1, 1]} : vector<8x384xf32> to vector<8x128xf32>
    %163 = arith.addf %162, %15 : vector<8x128xf32>
    %164 = arith.mulf %152, %163 : vector<8x128xf32>
    %165 = arith.addf %161, %164 : vector<8x128xf32>
    %166 = math.tanh %165 : vector<8x128xf32>
    %cst_46 = arith.constant 1.000000e+00 : f32
    %167 = vector.broadcast %cst_46 : f32 to vector<8x128xf32>
    %168 = arith.subf %167, %160 : vector<8x128xf32>
    %169 = arith.mulf %168, %166 : vector<8x128xf32>
    %170 = arith.mulf %160, %140 : vector<8x128xf32>
    %171 = arith.addf %169, %170 : vector<8x128xf32>
    %c5_i32 = arith.constant 5 : i32
    %172 = arith.index_cast %c5_i32 : i32 to index
    %c0_47 = arith.constant 0 : index
    %c0_48 = arith.constant 0 : index
    %173 = vector.load %arg12[%172, %c0_47, %c0_48] : memref<8x8x384xf32, #tpu.memory_space<vmem>>, vector<1x8x384xf32>
    %174 = vector.shape_cast %173 : vector<1x8x384xf32> to vector<8x384xf32>
    %cst_49 = arith.constant dense<0.000000e+00> : vector<8x384xf32>
    %175 = tpu.matmul %171, %12, %cst_49 {dimension_numbers = #tpu.dot_dimension_numbers<[1], [0], [0], [1], [0, 0, 1, 1], [], []>} : vector<8x128xf32>, vector<128x384xf32>, vector<8x384xf32> -> vector<8x384xf32>
    %176 = vector.extract_strided_slice %174 {offsets = [0, 0], sizes = [8, 128], strides = [1, 1]} : vector<8x384xf32> to vector<8x128xf32>
    %177 = vector.extract_strided_slice %175 {offsets = [0, 0], sizes = [8, 128], strides = [1, 1]} : vector<8x384xf32> to vector<8x128xf32>
    %178 = arith.addf %176, %177 : vector<8x128xf32>
    %179 = arith.negf %178 : vector<8x128xf32>
    %180 = math.exp %179 : vector<8x128xf32>
    %cst_50 = arith.constant 1.000000e+00 : f32
    %181 = vector.broadcast %cst_50 : f32 to vector<8x128xf32>
    %182 = arith.addf %181, %180 : vector<8x128xf32>
    %183 = arith.divf %181, %182 : vector<8x128xf32>
    %184 = vector.extract_strided_slice %174 {offsets = [0, 128], sizes = [8, 128], strides = [1, 1]} : vector<8x384xf32> to vector<8x128xf32>
    %185 = vector.extract_strided_slice %175 {offsets = [0, 128], sizes = [8, 128], strides = [1, 1]} : vector<8x384xf32> to vector<8x128xf32>
    %186 = arith.addf %184, %185 : vector<8x128xf32>
    %187 = arith.negf %186 : vector<8x128xf32>
    %188 = math.exp %187 : vector<8x128xf32>
    %cst_51 = arith.constant 1.000000e+00 : f32
    %189 = vector.broadcast %cst_51 : f32 to vector<8x128xf32>
    %190 = arith.addf %189, %188 : vector<8x128xf32>
    %191 = arith.divf %189, %190 : vector<8x128xf32>
    %192 = vector.extract_strided_slice %174 {offsets = [0, 256], sizes = [8, 128], strides = [1, 1]} : vector<8x384xf32> to vector<8x128xf32>
    %193 = vector.extract_strided_slice %175 {offsets = [0, 256], sizes = [8, 128], strides = [1, 1]} : vector<8x384xf32> to vector<8x128xf32>
    %194 = arith.addf %193, %15 : vector<8x128xf32>
    %195 = arith.mulf %183, %194 : vector<8x128xf32>
    %196 = arith.addf %192, %195 : vector<8x128xf32>
    %197 = math.tanh %196 : vector<8x128xf32>
    %cst_52 = arith.constant 1.000000e+00 : f32
    %198 = vector.broadcast %cst_52 : f32 to vector<8x128xf32>
    %199 = arith.subf %198, %191 : vector<8x128xf32>
    %200 = arith.mulf %199, %197 : vector<8x128xf32>
    %201 = arith.mulf %191, %171 : vector<8x128xf32>
    %202 = arith.addf %200, %201 : vector<8x128xf32>
    %c6_i32 = arith.constant 6 : i32
    %203 = arith.index_cast %c6_i32 : i32 to index
    %c0_53 = arith.constant 0 : index
    %c0_54 = arith.constant 0 : index
    %204 = vector.load %arg12[%203, %c0_53, %c0_54] : memref<8x8x384xf32, #tpu.memory_space<vmem>>, vector<1x8x384xf32>
    %205 = vector.shape_cast %204 : vector<1x8x384xf32> to vector<8x384xf32>
    %cst_55 = arith.constant dense<0.000000e+00> : vector<8x384xf32>
    %206 = tpu.matmul %202, %12, %cst_55 {dimension_numbers = #tpu.dot_dimension_numbers<[1], [0], [0], [1], [0, 0, 1, 1], [], []>} : vector<8x128xf32>, vector<128x384xf32>, vector<8x384xf32> -> vector<8x384xf32>
    %207 = vector.extract_strided_slice %205 {offsets = [0, 0], sizes = [8, 128], strides = [1, 1]} : vector<8x384xf32> to vector<8x128xf32>
    %208 = vector.extract_strided_slice %206 {offsets = [0, 0], sizes = [8, 128], strides = [1, 1]} : vector<8x384xf32> to vector<8x128xf32>
    %209 = arith.addf %207, %208 : vector<8x128xf32>
    %210 = arith.negf %209 : vector<8x128xf32>
    %211 = math.exp %210 : vector<8x128xf32>
    %cst_56 = arith.constant 1.000000e+00 : f32
    %212 = vector.broadcast %cst_56 : f32 to vector<8x128xf32>
    %213 = arith.addf %212, %211 : vector<8x128xf32>
    %214 = arith.divf %212, %213 : vector<8x128xf32>
    %215 = vector.extract_strided_slice %205 {offsets = [0, 128], sizes = [8, 128], strides = [1, 1]} : vector<8x384xf32> to vector<8x128xf32>
    %216 = vector.extract_strided_slice %206 {offsets = [0, 128], sizes = [8, 128], strides = [1, 1]} : vector<8x384xf32> to vector<8x128xf32>
    %217 = arith.addf %215, %216 : vector<8x128xf32>
    %218 = arith.negf %217 : vector<8x128xf32>
    %219 = math.exp %218 : vector<8x128xf32>
    %cst_57 = arith.constant 1.000000e+00 : f32
    %220 = vector.broadcast %cst_57 : f32 to vector<8x128xf32>
    %221 = arith.addf %220, %219 : vector<8x128xf32>
    %222 = arith.divf %220, %221 : vector<8x128xf32>
    %223 = vector.extract_strided_slice %205 {offsets = [0, 256], sizes = [8, 128], strides = [1, 1]} : vector<8x384xf32> to vector<8x128xf32>
    %224 = vector.extract_strided_slice %206 {offsets = [0, 256], sizes = [8, 128], strides = [1, 1]} : vector<8x384xf32> to vector<8x128xf32>
    %225 = arith.addf %224, %15 : vector<8x128xf32>
    %226 = arith.mulf %214, %225 : vector<8x128xf32>
    %227 = arith.addf %223, %226 : vector<8x128xf32>
    %228 = math.tanh %227 : vector<8x128xf32>
    %cst_58 = arith.constant 1.000000e+00 : f32
    %229 = vector.broadcast %cst_58 : f32 to vector<8x128xf32>
    %230 = arith.subf %229, %222 : vector<8x128xf32>
    %231 = arith.mulf %230, %228 : vector<8x128xf32>
    %232 = arith.mulf %222, %202 : vector<8x128xf32>
    %233 = arith.addf %231, %232 : vector<8x128xf32>
    %c7_i32 = arith.constant 7 : i32
    %234 = arith.index_cast %c7_i32 : i32 to index
    %c0_59 = arith.constant 0 : index
    %c0_60 = arith.constant 0 : index
    %235 = vector.load %arg12[%234, %c0_59, %c0_60] : memref<8x8x384xf32, #tpu.memory_space<vmem>>, vector<1x8x384xf32>
    %236 = vector.shape_cast %235 : vector<1x8x384xf32> to vector<8x384xf32>
    %cst_61 = arith.constant dense<0.000000e+00> : vector<8x384xf32>
    %237 = tpu.matmul %233, %12, %cst_61 {dimension_numbers = #tpu.dot_dimension_numbers<[1], [0], [0], [1], [0, 0, 1, 1], [], []>} : vector<8x128xf32>, vector<128x384xf32>, vector<8x384xf32> -> vector<8x384xf32>
    %238 = vector.extract_strided_slice %236 {offsets = [0, 0], sizes = [8, 128], strides = [1, 1]} : vector<8x384xf32> to vector<8x128xf32>
    %239 = vector.extract_strided_slice %237 {offsets = [0, 0], sizes = [8, 128], strides = [1, 1]} : vector<8x384xf32> to vector<8x128xf32>
    %240 = arith.addf %238, %239 : vector<8x128xf32>
    %241 = arith.negf %240 : vector<8x128xf32>
    %242 = math.exp %241 : vector<8x128xf32>
    %cst_62 = arith.constant 1.000000e+00 : f32
    %243 = vector.broadcast %cst_62 : f32 to vector<8x128xf32>
    %244 = arith.addf %243, %242 : vector<8x128xf32>
    %245 = arith.divf %243, %244 : vector<8x128xf32>
    %246 = vector.extract_strided_slice %236 {offsets = [0, 128], sizes = [8, 128], strides = [1, 1]} : vector<8x384xf32> to vector<8x128xf32>
    %247 = vector.extract_strided_slice %237 {offsets = [0, 128], sizes = [8, 128], strides = [1, 1]} : vector<8x384xf32> to vector<8x128xf32>
    %248 = arith.addf %246, %247 : vector<8x128xf32>
    %249 = arith.negf %248 : vector<8x128xf32>
    %250 = math.exp %249 : vector<8x128xf32>
    %cst_63 = arith.constant 1.000000e+00 : f32
    %251 = vector.broadcast %cst_63 : f32 to vector<8x128xf32>
    %252 = arith.addf %251, %250 : vector<8x128xf32>
    %253 = arith.divf %251, %252 : vector<8x128xf32>
    %254 = vector.extract_strided_slice %236 {offsets = [0, 256], sizes = [8, 128], strides = [1, 1]} : vector<8x384xf32> to vector<8x128xf32>
    %255 = vector.extract_strided_slice %237 {offsets = [0, 256], sizes = [8, 128], strides = [1, 1]} : vector<8x384xf32> to vector<8x128xf32>
    %256 = arith.addf %255, %15 : vector<8x128xf32>
    %257 = arith.mulf %245, %256 : vector<8x128xf32>
    %258 = arith.addf %254, %257 : vector<8x128xf32>
    %259 = math.tanh %258 : vector<8x128xf32>
    %cst_64 = arith.constant 1.000000e+00 : f32
    %260 = vector.broadcast %cst_64 : f32 to vector<8x128xf32>
    %261 = arith.subf %260, %253 : vector<8x128xf32>
    %262 = arith.mulf %261, %259 : vector<8x128xf32>
    %263 = arith.mulf %253, %233 : vector<8x128xf32>
    %264 = arith.addf %262, %263 : vector<8x128xf32>
    %c8_i32 = arith.constant 8 : i32
    %c0_65 = arith.constant 0 : index
    %c0_66 = arith.constant 0 : index
    %265 = vector.load %arg11[%c0_65, %c0_66] : memref<8x128xf32, #tpu.memory_space<vmem>>, vector<8x128xf32>
    tpu.vector_store %arg11[%c0_65, %c0_66], %264 {strides = array<i32>} : memref<8x128xf32, #tpu.memory_space<vmem>>, vector<8x128xf32>,
    %c0_i32_67 = arith.constant 0 : i32
    %266 = arith.cmpi eq, %arg1, %c0_i32_67 : i32
    %267 = arith.extui %266 : i1 to i32
    %c0_i32_68 = arith.constant 0 : i32
    %268 = arith.cmpi ne, %267, %c0_i32_68 : i32
    scf.if %268 {
      %c0_69 = arith.constant 0 : index
      %c0_70 = arith.constant 0 : index
      %269 = vector.load %arg8[%c0_69, %c0_70] : memref<136x128xf32, #tpu.memory_space<vmem>>, vector<136x128xf32>
      %c0_71 = arith.constant 0 : index
      %c0_72 = arith.constant 0 : index
      %270 = vector.load %arg11[%c0_71, %c0_72] : memref<8x128xf32, #tpu.memory_space<vmem>>, vector<8x128xf32>
      %c0_73 = arith.constant 0 : index
      %c0_74 = arith.constant 0 : index
      %271 = vector.load %arg3[%c0_73, %c0_74] : memref<8x8xf32, #tpu.memory_space<vmem>>, vector<8x8xf32>
      %272 = tpu.concatenate %270, %271 in 1 : vector<8x128xf32>, vector<8x8xf32> -> vector<8x136xf32>
      %cst_75 = arith.constant dense<0.000000e+00> : vector<8x128xf32>
      %273 = tpu.matmul %272, %269, %cst_75 {dimension_numbers = #tpu.dot_dimension_numbers<[1], [0], [0], [1], [0, 0, 1, 1], [], []>} : vector<8x136xf32>, vector<136x128xf32>, vector<8x128xf32> -> vector<8x128xf32>
      %c0_76 = arith.constant 0 : index
      %c0_77 = arith.constant 0 : index
      %274 = vector.load %arg9[%c0_76, %c0_77] : memref<1x128xf32, #tpu.memory_space<vmem>>, vector<1x128xf32>
      %275 = vector.broadcast %274 : vector<1x128xf32> to vector<8x128xf32>
      %276 = arith.addf %273, %275 : vector<8x128xf32>
      %c0_78 = arith.constant 0 : index
      %c0_79 = arith.constant 0 : index
      %277 = vector.load %arg10[%c0_78, %c0_79] : memref<8x128xf32, #tpu.memory_space<vmem>>, vector<8x128xf32>
      tpu.vector_store %arg10[%c0_78, %c0_79], %276 {strides = array<i32>} : memref<8x128xf32, #tpu.memory_space<vmem>>, vector<8x128xf32>,
    } else {
    }
    return
  }
  func.func @transform_0(%arg0: i32, %arg1: i32) -> (i32, i32, i32) {
    %c0_i32 = arith.constant 0 : i32
    %c0_i32_0 = arith.constant 0 : i32
    return %arg1, %arg0, %c0_i32 : i32, i32, i32
  }
  func.func @transform_1(%arg0: i32, %arg1: i32) -> (i32, i32) {
    %c0_i32 = arith.constant 0 : i32
    %c0_i32_0 = arith.constant 0 : i32
    return %arg0, %c0_i32 : i32, i32
  }
  func.func @transform_2(%arg0: i32, %arg1: i32) -> (i32, i32) {
    %c0_i32 = arith.constant 0 : i32
    %c0_i32_0 = arith.constant 0 : i32
    %c0_i32_1 = arith.constant 0 : i32
    return %c0_i32, %c0_i32_0 : i32, i32
  }
  func.func @transform_3(%arg0: i32, %arg1: i32) -> (i32, i32) {
    %c0_i32 = arith.constant 0 : i32
    %c0_i32_0 = arith.constant 0 : i32
    %c0_i32_1 = arith.constant 0 : i32
    return %c0_i32, %c0_i32_0 : i32, i32
  }
  func.func @transform_4(%arg0: i32, %arg1: i32) -> (i32, i32) {
    %c0_i32 = arith.constant 0 : i32
    %c0_i32_0 = arith.constant 0 : i32
    %c0_i32_1 = arith.constant 0 : i32
    return %c0_i32, %c0_i32_0 : i32, i32
  }
  func.func @transform_5(%arg0: i32, %arg1: i32) -> (i32, i32) {
    %c0_i32 = arith.constant 0 : i32
    %c0_i32_0 = arith.constant 0 : i32
    %c0_i32_1 = arith.constant 0 : i32
    return %c0_i32, %c0_i32_0 : i32, i32
  }
  func.func @transform_6(%arg0: i32, %arg1: i32) -> (i32, i32) {
    %c0_i32 = arith.constant 0 : i32
    %c0_i32_0 = arith.constant 0 : i32
    %c0_i32_1 = arith.constant 0 : i32
    return %c0_i32, %c0_i32_0 : i32, i32
  }
  func.func @transform_7(%arg0: i32, %arg1: i32) -> (i32, i32) {
    %c0_i32 = arith.constant 0 : i32
    %c0_i32_0 = arith.constant 0 : i32
    %c0_i32_1 = arith.constant 0 : i32
    return %c0_i32, %c0_i32_0 : i32, i32
  }
  func.func @transform_8(%arg0: i32, %arg1: i32) -> (i32, i32) {
    %c0_i32 = arith.constant 0 : i32
    %c0_i32_0 = arith.constant 0 : i32
    return %arg0, %c0_i32 : i32, i32
  }
}

</mosaic_0001>

<llo_original>
// kernel: tpu_custom_call.1
$region0: #{tpu_custom_call.1}
  #allocation0 [shape = 'u32[]', space=smem, size = 0x4, offset = 0x4, fixed_abs, tag = 'smem constant byte address 0x4 - core index']
  #allocation1 [shape = 'u32[144,128]{1,0:T(1,128)}', space=vmem, size = 0x12000, scoped, tag = 'internal scratch']
  #allocation2 [shape = 'f32[8,128]{1,0:T(8,128)}', space=vmem, size = 0x1000, scoped, tag = 'scratch operand']
  #allocation3 [shape = 'f32[8,8,384]{2,1,0:T(8,128)}', space=vmem, size = 0x18000, scoped, tag = 'scratch operand']
  %s0 = inlined_call_operand.vmem [shape: f32[8,8,4], index: 0, kind: input, shape index: {}]
  %s1 = inlined_call_operand.vmem [shape: f32[8,8], index: 1, kind: input, shape index: {}]
  %s2 = inlined_call_operand.vmem [shape: f32[4,384], index: 2, kind: input, shape index: {}]
  %s3 = inlined_call_operand.hbm [shape: f32[128,384], index: 3, kind: input, shape index: {}]
  %s4 = inlined_call_operand.vmem [shape: f32[1,384], index: 4, kind: input, shape index: {}]
  %s5 = inlined_call_operand.vmem [shape: f32[1,128], index: 5, kind: input, shape index: {}]
  %s6 = inlined_call_operand.hbm [shape: f32[136,128], index: 6, kind: input, shape index: {}]
  %s7 = inlined_call_operand.vmem [shape: f32[1,128], index: 7, kind: input, shape index: {}]
  %s8 = inlined_call_operand.hbm [shape: f32[8,128], index: 8, kind: output, shape index: {}]
  %s9 = sld [smem:[#allocation0]]
  $region58: #{tpu_custom_call.1} parent=0
    _
  %s11 = ssub.s32 1, %s9
  %s12 = scalar_select 0, %s11, %s9
  $region1: #{tpu_custom_call.1} parent=0
    #allocation4 [shape = 'u8[196608]{0}', space=vmem, size = 0x30000, scoped, tag = 'input window, operand 3, single buffered']
    #allocation5 [shape = 's32[1]{0}', space=sflag, size = 0x4, scoped, tag = 'scoped memory for tpu_custom_call.1']
    #allocation6 [shape = 's32[1]{0}', space=sflag, size = 0x4, scoped, tag = 'scoped memory for tpu_custom_call.1']
    #allocation7 [shape = 'u8[69632]{0}', space=vmem, size = 0x11000, scoped, tag = 'input window, operand 6, single buffered']
    #allocation8 [shape = 's32[1]{0}', space=sflag, size = 0x4, scoped, tag = 'scoped memory for tpu_custom_call.1']
    #allocation9 [shape = 'u8[4096]{0}', space=vmem, size = 0x1000, scoped, tag = 'output window, operand 0, single buffered']
    %13 = vsyncpa [#allocation5], 0
    %14 = vsyncpa [#allocation8], 0
    %15 = vsyncpa [#allocation6], 0
    // Predicated region
    $region2: #{tpu_custom_call.1} parent=1 // pred_check
      _
    $region3: #{tpu_custom_call.1} parent=1 // pred_check_branch
      %17 = sbr.rel (0) target = $region5
    $region4: #{tpu_custom_call.1} parent=1 // pred_region
      _
    $region5: #{tpu_custom_call.1} parent=1 // pred_fallthru
      _
    // Predicated region
    $region6: #{tpu_custom_call.1} parent=1 // pred_check
      _
    $region7: #{tpu_custom_call.1} parent=1 // pred_check_branch
      %19 = sbr.rel (0) target = $region9
    $region8: #{tpu_custom_call.1} parent=1 // pred_region
      _
    $region9: #{tpu_custom_call.1} parent=1 // pred_fallthru
      _
    // Predicated region
    $region10: #{tpu_custom_call.1} parent=1 // pred_check
      _
    $region11: #{tpu_custom_call.1} parent=1 // pred_check_branch
      %21 = sbr.rel (0) target = $region13
    $region12: #{tpu_custom_call.1} parent=1 // pred_region
      _
    $region13: #{tpu_custom_call.1} parent=1 // pred_fallthru
      _
    // Predicated region
    $region14: #{tpu_custom_call.1} parent=1 // pred_check
      _
    $region15: #{tpu_custom_call.1} parent=1 // pred_check_branch
      %23 = sbr.rel (0) target = $region17
    $region16: #{tpu_custom_call.1} parent=1 // pred_region
      %s25 = ssub.s32 6144, 6144
      %26 = vsyncadd [#allocation5], %s25
      %s27 = sshll.u32 [#allocation4], 4
      %s28 = int_to_ptr.vmem [resolvable:$true] %s27
      %33 = dma.hbm_to_vmem [thread:$0]  %s3, 6144, %s28, [#allocation5], 384, 384, 24
    $region17: #{tpu_custom_call.1} parent=1 // pred_fallthru
      _
    // Predicated region
    $region18: #{tpu_custom_call.1} parent=1 // pred_check
      _
    $region19: #{tpu_custom_call.1} parent=1 // pred_check_branch
      %35 = sbr.rel (0) target = $region21
    $region20: #{tpu_custom_call.1} parent=1 // pred_region
      _
    $region21: #{tpu_custom_call.1} parent=1 // pred_fallthru
      _
    // Predicated region
    $region22: #{tpu_custom_call.1} parent=1 // pred_check
      _
    $region23: #{tpu_custom_call.1} parent=1 // pred_check_branch
      %37 = sbr.rel (0) target = $region25
    $region24: #{tpu_custom_call.1} parent=1 // pred_region
      _
    $region25: #{tpu_custom_call.1} parent=1 // pred_fallthru
      _
    // Predicated region
    $region26: #{tpu_custom_call.1} parent=1 // pred_check
      _
    $region27: #{tpu_custom_call.1} parent=1 // pred_check_branch
      %39 = sbr.rel (0) target = $region29
    $region28: #{tpu_custom_call.1} parent=1 // pred_region
      %s41 = ssub.s32 2176, 2176
      %42 = vsyncadd [#allocation8], %s41
      %s43 = sshll.u32 [#allocation7], 4
      %s44 = int_to_ptr.vmem [resolvable:$true] %s43
      %49 = dma.hbm_to_vmem [thread:$0]  %s6, 2176, %s44, [#allocation8], 128, 128, 8
    $region29: #{tpu_custom_call.1} parent=1 // pred_fallthru
      _
    // Predicated region
    $region30: #{tpu_custom_call.1} parent=1 // pred_check
      _
    $region31: #{tpu_custom_call.1} parent=1 // pred_check_branch
      %51 = sbr.rel (0) target = $region33
    $region32: #{tpu_custom_call.1} parent=1 // pred_region
      _
    $region33: #{tpu_custom_call.1} parent=1 // pred_fallthru
      _
    // Predicated region
    $region34: #{tpu_custom_call.1} parent=1 // pred_check
      _
    $region35: #{tpu_custom_call.1} parent=1 // pred_check_branch
      %53 = sbr.rel (0) target = $region37
    $region36: #{tpu_custom_call.1} parent=1 // pred_region
      %54 = dma.done [#allocation5], 6144
    $region37: #{tpu_custom_call.1} parent=1 // pred_fallthru
      _
    // Predicated region
    $region38: #{tpu_custom_call.1} parent=1 // pred_check
      _
    $region39: #{tpu_custom_call.1} parent=1 // pred_check_branch
      %56 = sbr.rel (0) target = $region41
    $region40: #{tpu_custom_call.1} parent=1 // pred_region
      %57 = dma.done [#allocation8], 2176
    $region41: #{tpu_custom_call.1} parent=1 // pred_fallthru
      _
    %p58 = scmp.eq.s32.totalorder 0, 0
    // Predicated region
    $region42: #{tpu_custom_call.1} parent=1 // pred_check
      %p59 = pneg %p58
    $region43: #{tpu_custom_call.1} parent=1 // pred_check_branch
      %61 = sbr.rel (%p59) target = $region45
    $region44: #{tpu_custom_call.1} parent=1 // pred_region
      %62 = vst [vmem:[#allocation2] sm:$0xff] 0.0
    $region45: #{tpu_custom_call.1} parent=1 // pred_fallthru
      _
    %v63 = vld [vmem:[%s0] sm:$0xff]
    %v64 = vld [vmem:[%s0 + $0x8] sm:$0xff]
    %v65 = vld [vmem:[%s0 + $0x10] sm:$0xff]
    %v66 = vld [vmem:[%s0 + $0x18] sm:$0xff]
    %v67 = vld [vmem:[%s0 + $0x20] sm:$0xff]
    %v68 = vld [vmem:[%s0 + $0x28] sm:$0xff]
    %v69 = vld [vmem:[%s0 + $0x30] sm:$0xff]
    %v70 = vld [vmem:[%s0 + $0x38] sm:$0xff]
    %v71 = vld [vmem:[%s2] sm:$0xff]
    %v72 = vld [vmem:[%s2 + $0x8] sm:$0xf]
    %v73 = vld [vmem:[%s4] sm:$0x7]
    %v75 = vlaneseq
    %v76 = vshrl.u32 %v75, 7
    %v77 = vsub.s32 0, %v76
    %v78 = vrot.slane %v73, %v77
    %v79 = vlaneseq
    %v80 = vshrl.u32 %v79, 7
    %v81 = vsub.s32 1, %v80
    %v82 = vrot.slane %v73, %v81
    %v83 = vlaneseq
    %v84 = vshrl.u32 %v83, 7
    %v85 = vsub.s32 2, %v84
    %v86 = vrot.slane %v73, %v85
    %v92 = vcombine.high %v71, %v71
    %vm93 = vcmask 31744
    %v95 = vsel %vm93, %v63, 0
    %v98 = vsel %vm93, %v64, 0
    %v101 = vsel %vm93, %v65, 0
    %v104 = vsel %vm93, %v66, 0
    %v107 = vsel %vm93, %v67, 0
    %v110 = vsel %vm93, %v68, 0
    %v113 = vsel %vm93, %v69, 0
    %v116 = vsel %vm93, %v70, 0
    %vm118 = vcmask 1043456
    %v119 = vsel %vm118, %v71, 0
    %v121 = vsel %vm118, %v92, 0
    %v123 = vsel %vm118, %v72, 0
    %125 = vmatprep.subr.mxu0 0.0
    %126 = vmatpush1.msra.mxu0 0.0
    %127 = vmatprep.subr.mxu0 0.0
    %128 = vmatpush1.msra.mxu0 0.0
    %129 = vmatprep.subr.mxu0 0.0
    %130 = vmatpush1.msra.mxu0 0.0
    %131 = vmatprep.subr.mxu0 0.0
    %132 = vmatpush1.msra.mxu0 0.0
    %133 = vmatprep.subr.mxu0 0.0
    %134 = vmatpush1.msra.mxu0 0.0
    %135 = vmatprep.subr.mxu0 0.0
    %136 = vmatpush1.msra.mxu0 0.0
    %137 = vmatprep.subr.mxu0 0.0
    %138 = vmatpush1.msra.mxu0 0.0
    %139 = vmatprep.subr.mxu0 0.0
    %140 = vmatpush1.msra.mxu0 0.0
    %141 = vmatprep.subr.mxu0 0.0
    %142 = vmatpush1.msra.mxu0 0.0
    %143 = vmatprep.subr.mxu0 0.0
    %144 = vmatpush1.msra.mxu0 0.0
    %145 = vmatprep.subr.mxu0 0.0
    %146 = vmatpush1.msra.mxu0 0.0
    %147 = vmatprep.subr.mxu0 0.0
    %148 = vmatpush1.msra.mxu0 0.0
    %149 = vmatprep.subr.mxu0 0.0
    %150 = vmatpush1.msra.mxu0 0.0
    %151 = vmatprep.subr.mxu0 0.0
    %152 = vmatpush1.msra.mxu0 0.0
    %153 = vmatprep.subr.mxu0 0.0
    %154 = vmatpush1.msra.mxu0 0.0
    %155 = vmatprep.subr.mxu0 %v121
    %156 = vmatpush1.msra.mxu0 %v119
    %157 = vmatprep.subr.mxu0 0.0
    %158 = vmatpush2.msra.mxu0 0.0
    %159 = vmatprep.subr.mxu0 0.0
    %160 = vmatpush2.msra.mxu0 0.0
    %161 = vmatprep.subr.mxu0 0.0
    %162 = vmatpush2.msra.mxu0 0.0
    %163 = vmatprep.subr.mxu0 0.0
    %164 = vmatpush2.msra.mxu0 0.0
    %165 = vmatprep.subr.mxu0 0.0
    %166 = vmatpush2.msra.mxu0 0.0
    %167 = vmatprep.subr.mxu0 0.0
    %168 = vmatpush2.msra.mxu0 0.0
    %169 = vmatprep.subr.mxu0 0.0
    %170 = vmatpush2.msra.mxu0 0.0
    %171 = vmatprep.subr.mxu0 0.0
    %172 = vmatpush2.msra.mxu0 0.0
    %173 = vmatprep.subr.mxu0 0.0
    %174 = vmatpush2.msra.mxu0 0.0
    %175 = vmatprep.subr.mxu0 0.0
    %176 = vmatpush2.msra.mxu0 0.0
    %177 = vmatprep.subr.mxu0 0.0
    %178 = vmatpush2.msra.mxu0 0.0
    %179 = vmatprep.subr.mxu0 0.0
    %180 = vmatpush2.msra.mxu0 0.0
    %181 = vmatprep.subr.mxu0 0.0
    %182 = vmatpush2.msra.mxu0 0.0
    %183 = vmatprep.subr.mxu0 0.0
    %184 = vmatpush2.msra.mxu0 0.0
    %185 = vmatprep.subr.mxu0 0.0
    %186 = vmatpush2.msra.mxu0 0.0
    %187 = vmatprep.subr.mxu0 0.0
    %188 = vmatpush2.msra.mxu0 0.0
    %189 = vmatprep.mubr.f32.mxu0 0.0
    %190 = vmatmul.mubr.f32.gmra.mxu0 %v95
    %v191 = vpop.f32.mrf.mxu0
    %v192 = vadd.f32 %v78, %v191
    %v193 = vpop.f32.mrf.mxu0
    %v194 = vadd.f32 %v82, %v193
    %195 = vmatprep.mubr.f32.mxu0 0.0
    %196 = vmatmul.mubr.f32.gmra.mxu0 %v98
    %v197 = vpop.f32.mrf.mxu0
    %v198 = vadd.f32 %v78, %v197
    %v199 = vpop.f32.mrf.mxu0
    %v200 = vadd.f32 %v82, %v199
    %201 = vmatprep.mubr.f32.mxu0 0.0
    %202 = vmatmul.mubr.f32.gmra.mxu0 %v101
    %v203 = vpop.f32.mrf.mxu0
    %v204 = vadd.f32 %v78, %v203
    %v205 = vpop.f32.mrf.mxu0
    %v206 = vadd.f32 %v82, %v205
    %207 = vmatprep.mubr.f32.mxu0 0.0
    %208 = vmatmul.mubr.f32.gmra.mxu0 %v104
    %v209 = vpop.f32.mrf.mxu0
    %v210 = vadd.f32 %v78, %v209
    %v211 = vpop.f32.mrf.mxu0
    %v212 = vadd.f32 %v82, %v211
    %213 = vmatprep.mubr.f32.mxu0 0.0
    %214 = vmatmul.mubr.f32.gmra.mxu0 %v107
    %v215 = vpop.f32.mrf.mxu0
    %v216 = vadd.f32 %v78, %v215
    %v217 = vpop.f32.mrf.mxu0
    %v218 = vadd.f32 %v82, %v217
    %219 = vmatprep.mubr.f32.mxu0 0.0
    %220 = vmatmul.mubr.f32.gmra.mxu0 %v110
    %v221 = vpop.f32.mrf.mxu0
    %v222 = vadd.f32 %v78, %v221
    %v223 = vpop.f32.mrf.mxu0
    %v224 = vadd.f32 %v82, %v223
    %225 = vmatprep.mubr.f32.mxu0 0.0
    %226 = vmatmul.mubr.f32.gmra.mxu0 %v113
    %v227 = vpop.f32.mrf.mxu0
    %v228 = vadd.f32 %v78, %v227
    %v229 = vpop.f32.mrf.mxu0
    %v230 = vadd.f32 %v82, %v229
    %231 = vmatprep.mubr.f32.mxu0 0.0
    %232 = vmatmul.mubr.f32.gmra.mxu0 %v116
    %v233 = vpop.f32.mrf.mxu0
    %v234 = vadd.f32 %v78, %v233
    %v235 = vpop.f32.mrf.mxu0
    %v236 = vadd.f32 %v82, %v235
    %237 = vdwg.mxu0
    %238 = vmatprep.subr.mxu0 0.0
    %239 = vmatpush1.msra.mxu0 0.0
    %240 = vmatprep.subr.mxu0 0.0
    %241 = vmatpush1.msra.mxu0 0.0
    %242 = vmatprep.subr.mxu0 0.0
    %243 = vmatpush1.msra.mxu0 0.0
    %244 = vmatprep.subr.mxu0 0.0
    %245 = vmatpush1.msra.mxu0 0.0
    %246 = vmatprep.subr.mxu0 0.0
    %247 = vmatpush1.msra.mxu0 0.0
    %248 = vmatprep.subr.mxu0 0.0
    %249 = vmatpush1.msra.mxu0 0.0
    %250 = vmatprep.subr.mxu0 0.0
    %251 = vmatpush1.msra.mxu0 0.0
    %252 = vmatprep.subr.mxu0 0.0
    %253 = vmatpush1.msra.mxu0 0.0
    %254 = vmatprep.subr.mxu0 0.0
    %255 = vmatpush1.msra.mxu0 0.0
    %256 = vmatprep.subr.mxu0 0.0
    %257 = vmatpush1.msra.mxu0 0.0
    %258 = vmatprep.subr.mxu0 0.0
    %259 = vmatpush1.msra.mxu0 0.0
    %260 = vmatprep.subr.mxu0 0.0
    %261 = vmatpush1.msra.mxu0 0.0
    %262 = vmatprep.subr.mxu0 0.0
    %263 = vmatpush1.msra.mxu0 0.0
    %264 = vmatprep.subr.mxu0 0.0
    %265 = vmatpush1.msra.mxu0 0.0
    %266 = vmatprep.subr.mxu0 0.0
    %267 = vmatpush1.msra.mxu0 0.0
    %268 = vmatprep.subr.mxu0 0.0
    %269 = vmatpush1.msra.mxu0 %v123
    %270 = vmatprep.subr.mxu0 0.0
    %271 = vmatpush2.msra.mxu0 0.0
    %272 = vmatprep.subr.mxu0 0.0
    %273 = vmatpush2.msra.mxu0 0.0
    %274 = vmatprep.subr.mxu0 0.0
    %275 = vmatpush2.msra.mxu0 0.0
    %276 = vmatprep.subr.mxu0 0.0
    %277 = vmatpush2.msra.mxu0 0.0
    %278 = vmatprep.subr.mxu0 0.0
    %279 = vmatpush2.msra.mxu0 0.0
    %280 = vmatprep.subr.mxu0 0.0
    %281 = vmatpush2.msra.mxu0 0.0
    %282 = vmatprep.subr.mxu0 0.0
    %283 = vmatpush2.msra.mxu0 0.0
    %284 = vmatprep.subr.mxu0 0.0
    %285 = vmatpush2.msra.mxu0 0.0
    %286 = vmatprep.subr.mxu0 0.0
    %287 = vmatpush2.msra.mxu0 0.0
    %288 = vmatprep.subr.mxu0 0.0
    %289 = vmatpush2.msra.mxu0 0.0
    %290 = vmatprep.subr.mxu0 0.0
    %291 = vmatpush2.msra.mxu0 0.0
    %292 = vmatprep.subr.mxu0 0.0
    %293 = vmatpush2.msra.mxu0 0.0
    %294 = vmatprep.subr.mxu0 0.0
    %295 = vmatpush2.msra.mxu0 0.0
    %296 = vmatprep.subr.mxu0 0.0
    %297 = vmatpush2.msra.mxu0 0.0
    %298 = vmatprep.subr.mxu0 0.0
    %299 = vmatpush2.msra.mxu0 0.0
    %300 = vmatprep.subr.mxu0 0.0
    %301 = vmatpush2.msra.mxu0 0.0
    %302 = vmatprep.mubr.f32.mxu0 0.0
    %303 = vmatmul.mubr.f32.gmra.mxu0 %v95
    %v304 = vpop.f32.mrf.mxu0
    %v305 = vadd.f32 %v86, %v304
    %v306 = vpop.f32.mrf.mxu0
    %307 = vmatprep.mubr.f32.mxu0 0.0
    %308 = vmatmul.mubr.f32.gmra.mxu0 %v98
    %v309 = vpop.f32.mrf.mxu0
    %v310 = vadd.f32 %v86, %v309
    %v311 = vpop.f32.mrf.mxu0
    %312 = vmatprep.mubr.f32.mxu0 0.0
    %313 = vmatmul.mubr.f32.gmra.mxu0 %v101
    %v314 = vpop.f32.mrf.mxu0
    %v315 = vadd.f32 %v86, %v314
    %v316 = vpop.f32.mrf.mxu0
    %317 = vmatprep.mubr.f32.mxu0 0.0
    %318 = vmatmul.mubr.f32.gmra.mxu0 %v104
    %v319 = vpop.f32.mrf.mxu0
    %v320 = vadd.f32 %v86, %v319
    %v321 = vpop.f32.mrf.mxu0
    %322 = vmatprep.mubr.f32.mxu0 0.0
    %323 = vmatmul.mubr.f32.gmra.mxu0 %v107
    %v324 = vpop.f32.mrf.mxu0
    %v325 = vadd.f32 %v86, %v324
    %v326 = vpop.f32.mrf.mxu0
    %327 = vmatprep.mubr.f32.mxu0 0.0
    %328 = vmatmul.mubr.f32.gmra.mxu0 %v110
    %v329 = vpop.f32.mrf.mxu0
    %v330 = vadd.f32 %v86, %v329
    %v331 = vpop.f32.mrf.mxu0
    %332 = vmatprep.mubr.f32.mxu0 0.0
    %333 = vmatmul.mubr.f32.gmra.mxu0 %v113
    %v334 = vpop.f32.mrf.mxu0
    %v335 = vadd.f32 %v86, %v334
    %v336 = vpop.f32.mrf.mxu0
    %337 = vmatprep.mubr.f32.mxu0 0.0
    %338 = vmatmul.mubr.f32.gmra.mxu0 %v116
    %v339 = vpop.f32.mrf.mxu0
    %v340 = vadd.f32 %v86, %v339
    %v341 = vpop.f32.mrf.mxu0
    %342 = vdwg.mxu0
    %343 = vst [vmem:[#allocation3] sm:$0xff] %v192
    %344 = vst [vmem:[#allocation3 + $0x8] sm:$0xff] %v194
    %345 = vst [vmem:[#allocation3 + $0x10] sm:$0xff] %v305
    %346 = vst [vmem:[#allocation3 + $0x18] sm:$0xff] %v198
    %347 = vst [vmem:[#allocation3 + $0x20] sm:$0xff] %v200
    %348 = vst [vmem:[#allocation3 + $0x28] sm:$0xff] %v310
    %349 = vst [vmem:[#allocation3 + $0x30] sm:$0xff] %v204
    %350 = vst [vmem:[#allocation3 + $0x38] sm:$0xff] %v206
    %351 = vst [vmem:[#allocation3 + $0x40] sm:$0xff] %v315
    %352 = vst [vmem:[#allocation3 + $0x48] sm:$0xff] %v210
    %353 = vst [vmem:[#allocation3 + $0x50] sm:$0xff] %v212
    %354 = vst [vmem:[#allocation3 + $0x58] sm:$0xff] %v320
    %355 = vst [vmem:[#allocation3 + $0x60] sm:$0xff] %v216
    %356 = vst [vmem:[#allocation3 + $0x68] sm:$0xff] %v218
    %357 = vst [vmem:[#allocation3 + $0x70] sm:$0xff] %v325
    %358 = vst [vmem:[#allocation3 + $0x78] sm:$0xff] %v222
    %359 = vst [vmem:[#allocation3 + $0x80] sm:$0xff] %v224
    %360 = vst [vmem:[#allocation3 + $0x88] sm:$0xff] %v330
    %361 = vst [vmem:[#allocation3 + $0x90] sm:$0xff] %v228
    %362 = vst [vmem:[#allocation3 + $0x98] sm:$0xff] %v230
    %363 = vst [vmem:[#allocation3 + $0xa0] sm:$0xff] %v335
    %364 = vst [vmem:[#allocation3 + $0xa8] sm:$0xff] %v234
    %365 = vst [vmem:[#allocation3 + $0xb0] sm:$0xff] %v236
    %366 = vst [vmem:[#allocation3 + $0xb8] sm:$0xff] %v340
    %v367 = vld [vmem:[#allocation4] sm:$0xff]
    %v368 = vld [vmem:[#allocation4 + $0x8] sm:$0xff]
    %v369 = vld [vmem:[#allocation4 + $0x10] sm:$0xff]
    %v370 = vld [vmem:[#allocation4 + $0x18] sm:$0xff]
    %v371 = vld [vmem:[#allocation4 + $0x20] sm:$0xff]
    %v372 = vld [vmem:[#allocation4 + $0x28] sm:$0xff]
    %v373 = vld [vmem:[#allocation4 + $0x30] sm:$0xff]
    %v374 = vld [vmem:[#allocation4 + $0x38] sm:$0xff]
    %v375 = vld [vmem:[#allocation4 + $0x40] sm:$0xff]
    %v376 = vld [vmem:[#allocation4 + $0x48] sm:$0xff]
    %v377 = vld [vmem:[#allocation4 + $0x50] sm:$0xff]
    %v378 = vld [vmem:[#allocation4 + $0x58] sm:$0xff]
    %v379 = vld [vmem:[#allocation4 + $0x60] sm:$0xff]
    %v380 = vld [vmem:[#allocation4 + $0x68] sm:$0xff]
    %v381 = vld [vmem:[#allocation4 + $0x70] sm:$0xff]
    %v382 = vld [vmem:[#allocation4 + $0x78] sm:$0xff]
    %v383 = vld [vmem:[#allocation4 + $0x80] sm:$0xff]
    %v384 = vld [vmem:[#allocation4 + $0x88] sm:$0xff]
    %v385 = vld [vmem:[#allocation4 + $0x90] sm:$0xff]
    %v386 = vld [vmem:[#allocation4 + $0x98] sm:$0xff]
    %v387 = vld [vmem:[#allocation4 + $0xa0] sm:$0xff]
    %v388 = vld [vmem:[#allocation4 + $0xa8] sm:$0xff]
    %v389 = vld [vmem:[#allocation4 + $0xb0] sm:$0xff]
    %v390 = vld [vmem:[#allocation4 + $0xb8] sm:$0xff]
    %v391 = vld [vmem:[#allocation4 + $0xc0] sm:$0xff]
    %v392 = vld [vmem:[#allocation4 + $0xc8] sm:$0xff]
    %v393 = vld [vmem:[#allocation4 + $0xd0] sm:$0xff]
    %v394 = vld [vmem:[#allocation4 + $0xd8] sm:$0xff]
    %v395 = vld [vmem:[#allocation4 + $0xe0] sm:$0xff]
    %v396 = vld [vmem:[#allocation4 + $0xe8] sm:$0xff]
    %v397 = vld [vmem:[#allocation4 + $0xf0] sm:$0xff]
    %v398 = vld [vmem:[#allocation4 + $0xf8] sm:$0xff]
    %v399 = vld [vmem:[#allocation4 + $0x100] sm:$0xff]
    %v400 = vld [vmem:[#allocation4 + $0x108] sm:$0xff]
    %v401 = vld [vmem:[#allocation4 + $0x110] sm:$0xff]
    %v402 = vld [vmem:[#allocation4 + $0x118] sm:$0xff]
    %v403 = vld [vmem:[#allocation4 + $0x120] sm:$0xff]
    %v404 = vld [vmem:[#allocation4 + $0x128] sm:$0xff]
    %v405 = vld [vmem:[#allocation4 + $0x130] sm:$0xff]
    %v406 = vld [vmem:[#allocation4 + $0x138] sm:$0xff]
    %v407 = vld [vmem:[#allocation4 + $0x140] sm:$0xff]
    %v408 = vld [vmem:[#allocation4 + $0x148] sm:$0xff]
    %v409 = vld [vmem:[#allocation4 + $0x150] sm:$0xff]
    %v410 = vld [vmem:[#allocation4 + $0x158] sm:$0xff]
    %v411 = vld [vmem:[#allocation4 + $0x160] sm:$0xff]
    %v412 = vld [vmem:[#allocation4 + $0x168] sm:$0xff]
    %v413 = vld [vmem:[#allocation4 + $0x170] sm:$0xff]
    %v414 = vld [vmem:[#allocation4 + $0x178] sm:$0xff]
    %v415 = vld [vmem:[%s5] sm:$0x1]
    %v417 = vlaneseq
    %v418 = vshrl.u32 %v417, 7
    %v419 = vsub.s32 0, %v418
    %v420 = vrot.slane %v415, %v419
    %v422 = vld [vmem:[#allocation2] sm:$0xff]
    %v423 = vld [vmem:[#allocation3] sm:$0xff]
    %v424 = vld [vmem:[#allocation3 + $0x8] sm:$0xff]
    %v425 = vld [vmem:[#allocation3 + $0x10] sm:$0xff]
    %426 = vmatprep.subr.mxu0 %v413
    %427 = vmatpush1.msra.mxu0 %v412
    %428 = vmatprep.subr.mxu0 %v410
    %429 = vmatpush1.msra.mxu0 %v409
    %430 = vmatprep.subr.mxu0 %v407
    %431 = vmatpush1.msra.mxu0 %v406
    %432 = vmatprep.subr.mxu0 %v404
    %433 = vmatpush1.msra.mxu0 %v403
    %434 = vmatprep.subr.mxu0 %v401
    %435 = vmatpush1.msra.mxu0 %v400
    %436 = vmatprep.subr.mxu0 %v398
    %437 = vmatpush1.msra.mxu0 %v397
    %438 = vmatprep.subr.mxu0 %v395
    %439 = vmatpush1.msra.mxu0 %v394
    %440 = vmatprep.subr.mxu0 %v392
    %441 = vmatpush1.msra.mxu0 %v391
    %442 = vmatprep.subr.mxu0 %v389
    %443 = vmatpush1.msra.mxu0 %v388
    %444 = vmatprep.subr.mxu0 %v386
    %445 = vmatpush1.msra.mxu0 %v385
    %446 = vmatprep.subr.mxu0 %v383
    %447 = vmatpush1.msra.mxu0 %v382
    %448 = vmatprep.subr.mxu0 %v380
    %449 = vmatpush1.msra.mxu0 %v379
    %450 = vmatprep.subr.mxu0 %v377
    %451 = vmatpush1.msra.mxu0 %v376
    %452 = vmatprep.subr.mxu0 %v374
    %453 = vmatpush1.msra.mxu0 %v373
    %454 = vmatprep.subr.mxu0 %v371
    %455 = vmatpush1.msra.mxu0 %v370
    %456 = vmatprep.subr.mxu0 %v368
    %457 = vmatpush1.msra.mxu0 %v367
    %458 = vmatprep.subr.mxu0 0.0
    %459 = vmatpush2.msra.mxu0 0.0
    %460 = vmatprep.subr.mxu0 0.0
    %461 = vmatpush2.msra.mxu0 0.0
    %462 = vmatprep.subr.mxu0 0.0
    %463 = vmatpush2.msra.mxu0 0.0
    %464 = vmatprep.subr.mxu0 0.0
    %465 = vmatpush2.msra.mxu0 0.0
    %466 = vmatprep.subr.mxu0 0.0
    %467 = vmatpush2.msra.mxu0 0.0
    %468 = vmatprep.subr.mxu0 0.0
    %469 = vmatpush2.msra.mxu0 0.0
    %470 = vmatprep.subr.mxu0 0.0
    %471 = vmatpush2.msra.mxu0 0.0
    %472 = vmatprep.subr.mxu0 0.0
    %473 = vmatpush2.msra.mxu0 0.0
    %474 = vmatprep.subr.mxu0 0.0
    %475 = vmatpush2.msra.mxu0 0.0
    %476 = vmatprep.subr.mxu0 0.0
    %477 = vmatpush2.msra.mxu0 0.0
    %478 = vmatprep.subr.mxu0 0.0
    %479 = vmatpush2.msra.mxu0 0.0
    %480 = vmatprep.subr.mxu0 0.0
    %481 = vmatpush2.msra.mxu0 0.0
    %482 = vmatprep.subr.mxu0 0.0
    %483 = vmatpush2.msra.mxu0 0.0
    %484 = vmatprep.subr.mxu0 0.0
    %485 = vmatpush2.msra.mxu0 0.0
    %486 = vmatprep.subr.mxu0 0.0
    %487 = vmatpush2.msra.mxu0 0.0
    %488 = vmatprep.subr.mxu0 0.0
    %489 = vmatpush2.msra.mxu0 0.0
    %490 = vmatprep.mubr.f32.mxu0 0.0
    %491 = vmatmul.mubr.f32.gmra.mxu0 %v422
    %v492 = vpop.f32.mrf.mxu0
    %v493 = vadd.f32 0.0, %v492
    %v494 = vpop.f32.mrf.mxu0
    %v495 = vadd.f32 0.0, %v494
    %496 = vdwg.mxu0
    %497 = vmatprep.subr.mxu0 0.0
    %498 = vmatpush1.msra.mxu0 %v414
    %499 = vmatprep.subr.mxu0 0.0
    %500 = vmatpush1.msra.mxu0 %v411
    %501 = vmatprep.subr.mxu0 0.0
    %502 = vmatpush1.msra.mxu0 %v408
    %503 = vmatprep.subr.mxu0 0.0
    %504 = vmatpush1.msra.mxu0 %v405
    %505 = vmatprep.subr.mxu0 0.0
    %506 = vmatpush1.msra.mxu0 %v402
    %507 = vmatprep.subr.mxu0 0.0
    %508 = vmatpush1.msra.mxu0 %v399
    %509 = vmatprep.subr.mxu0 0.0
    %510 = vmatpush1.msra.mxu0 %v396
    %511 = vmatprep.subr.mxu0 0.0
    %512 = vmatpush1.msra.mxu0 %v393
    %513 = vmatprep.subr.mxu0 0.0
    %514 = vmatpush1.msra.mxu0 %v390
    %515 = vmatprep.subr.mxu0 0.0
    %516 = vmatpush1.msra.mxu0 %v387
    %517 = vmatprep.subr.mxu0 0.0
    %518 = vmatpush1.msra.mxu0 %v384
    %519 = vmatprep.subr.mxu0 0.0
    %520 = vmatpush1.msra.mxu0 %v381
    %521 = vmatprep.subr.mxu0 0.0
    %522 = vmatpush1.msra.mxu0 %v378
    %523 = vmatprep.subr.mxu0 0.0
    %524 = vmatpush1.msra.mxu0 %v375
    %525 = vmatprep.subr.mxu0 0.0
    %526 = vmatpush1.msra.mxu0 %v372
    %527 = vmatprep.subr.mxu0 0.0
    %528 = vmatpush1.msra.mxu0 %v369
    %529 = vmatprep.subr.mxu0 0.0
    %530 = vmatpush2.msra.mxu0 0.0
    %531 = vmatprep.subr.mxu0 0.0
    %532 = vmatpush2.msra.mxu0 0.0
    %533 = vmatprep.subr.mxu0 0.0
    %534 = vmatpush2.msra.mxu0 0.0
    %535 = vmatprep.subr.mxu0 0.0
    %536 = vmatpush2.msra.mxu0 0.0
    %537 = vmatprep.subr.mxu0 0.0
    %538 = vmatpush2.msra.mxu0 0.0
    %539 = vmatprep.subr.mxu0 0.0
    %540 = vmatpush2.msra.mxu0 0.0
    %541 = vmatprep.subr.mxu0 0.0
    %542 = vmatpush2.msra.mxu0 0.0
    %543 = vmatprep.subr.mxu0 0.0
    %544 = vmatpush2.msra.mxu0 0.0
    %545 = vmatprep.subr.mxu0 0.0
    %546 = vmatpush2.msra.mxu0 0.0
    %547 = vmatprep.subr.mxu0 0.0
    %548 = vmatpush2.msra.mxu0 0.0
    %549 = vmatprep.subr.mxu0 0.0
    %550 = vmatpush2.msra.mxu0 0.0
    %551 = vmatprep.subr.mxu0 0.0
    %552 = vmatpush2.msra.mxu0 0.0
    %553 = vmatprep.subr.mxu0 0.0
    %554 = vmatpush2.msra.mxu0 0.0
    %555 = vmatprep.subr.mxu0 0.0
    %556 = vmatpush2.msra.mxu0 0.0
    %557 = vmatprep.subr.mxu0 0.0
    %558 = vmatpush2.msra.mxu0 0.0
    %559 = vmatprep.subr.mxu0 0.0
    %560 = vmatpush2.msra.mxu0 0.0
    %561 = vmatprep.mubr.f32.mxu0 0.0
    %562 = vmatmul.mubr.f32.gmra.mxu0 %v422
    %v563 = vpop.f32.mrf.mxu0
    %v564 = vadd.f32 0.0, %v563
    %v565 = vpop.f32.mrf.mxu0
    %566 = vdwg.mxu0
    %v567 = vadd.f32 %v423, %v493
    %v568 = vxor.u32 %v567, 2147483648
    %v569 = vmul.f32 %v568, 1.442695
    %v570 = vpow.pop %v569
    %v571 = vadd.f32 %v570, 1.0
    %v572 = vrcp.pop %v571
    %v573 = vmul.f32 1.0, %v572
    %v574 = vadd.f32 %v424, %v495
    %v575 = vxor.u32 %v574, 2147483648
    %v576 = vmul.f32 %v575, 1.442695
    %v577 = vpow.pop %v576
    %v578 = vadd.f32 %v577, 1.0
    %v579 = vrcp.pop %v578
    %v580 = vmul.f32 1.0, %v579
    %v581 = vadd.f32 %v564, %v420
    %v582 = vmul.f32 %v573, %v581
    %v583 = vadd.f32 %v425, %v582
    %v584 = vtanh.pop %v583
    %v585 = vsub.f32 1.0, %v580
    %v586 = vmul.f32 %v585, %v584
    %v587 = vmul.f32 %v580, %v422
    %v588 = vadd.f32 %v586, %v587
    %s589 = scalar_lea.vmem [#allocation3], 24
    %v590 = vld [vmem:[%s589] sm:$0xff]
    %v591 = vld [vmem:[%s589 + $0x8] sm:$0xff]
    %v592 = vld [vmem:[%s589 + $0x10] sm:$0xff]
    %593 = vmatprep.subr.mxu0 %v413
    %594 = vmatpush1.msra.mxu0 %v412
    %595 = vmatprep.subr.mxu0 %v410
    %596 = vmatpush1.msra.mxu0 %v409
    %597 = vmatprep.subr.mxu0 %v407
    %598 = vmatpush1.msra.mxu0 %v406
    %599 = vmatprep.subr.mxu0 %v404
    %600 = vmatpush1.msra.mxu0 %v403
    %601 = vmatprep.subr.mxu0 %v401
    %602 = vmatpush1.msra.mxu0 %v400
    %603 = vmatprep.subr.mxu0 %v398
    %604 = vmatpush1.msra.mxu0 %v397
    %605 = vmatprep.subr.mxu0 %v395
    %606 = vmatpush1.msra.mxu0 %v394
    %607 = vmatprep.subr.mxu0 %v392
    %608 = vmatpush1.msra.mxu0 %v391
    %609 = vmatprep.subr.mxu0 %v389
    %610 = vmatpush1.msra.mxu0 %v388
    %611 = vmatprep.subr.mxu0 %v386
    %612 = vmatpush1.msra.mxu0 %v385
    %613 = vmatprep.subr.mxu0 %v383
    %614 = vmatpush1.msra.mxu0 %v382
    %615 = vmatprep.subr.mxu0 %v380
    %616 = vmatpush1.msra.mxu0 %v379
    %617 = vmatprep.subr.mxu0 %v377
    %618 = vmatpush1.msra.mxu0 %v376
    %619 = vmatprep.subr.mxu0 %v374
    %620 = vmatpush1.msra.mxu0 %v373
    %621 = vmatprep.subr.mxu0 %v371
    %622 = vmatpush1.msra.mxu0 %v370
    %623 = vmatprep.subr.mxu0 %v368
    %624 = vmatpush1.msra.mxu0 %v367
    %625 = vmatprep.subr.mxu0 0.0
    %626 = vmatpush2.msra.mxu0 0.0
    %627 = vmatprep.subr.mxu0 0.0
    %628 = vmatpush2.msra.mxu0 0.0
    %629 = vmatprep.subr.mxu0 0.0
    %630 = vmatpush2.msra.mxu0 0.0
    %631 = vmatprep.subr.mxu0 0.0
    %632 = vmatpush2.msra.mxu0 0.0
    %633 = vmatprep.subr.mxu0 0.0
    %634 = vmatpush2.msra.mxu0 0.0
    %635 = vmatprep.subr.mxu0 0.0
    %636 = vmatpush2.msra.mxu0 0.0
    %637 = vmatprep.subr.mxu0 0.0
    %638 = vmatpush2.msra.mxu0 0.0
    %639 = vmatprep.subr.mxu0 0.0
    %640 = vmatpush2.msra.mxu0 0.0
    %641 = vmatprep.subr.mxu0 0.0
    %642 = vmatpush2.msra.mxu0 0.0
    %643 = vmatprep.subr.mxu0 0.0
    %644 = vmatpush2.msra.mxu0 0.0
    %645 = vmatprep.subr.mxu0 0.0
    %646 = vmatpush2.msra.mxu0 0.0
    %647 = vmatprep.subr.mxu0 0.0
    %648 = vmatpush2.msra.mxu0 0.0
    %649 = vmatprep.subr.mxu0 0.0
    %650 = vmatpush2.msra.mxu0 0.0
    %651 = vmatprep.subr.mxu0 0.0
    %652 = vmatpush2.msra.mxu0 0.0
    %653 = vmatprep.subr.mxu0 0.0
    %654 = vmatpush2.msra.mxu0 0.0
    %655 = vmatprep.subr.mxu0 0.0
    %656 = vmatpush2.msra.mxu0 0.0
    %657 = vmatprep.mubr.f32.mxu0 0.0
    %658 = vmatmul.mubr.f32.gmra.mxu0 %v588
    %v659 = vpop.f32.mrf.mxu0
    %v660 = vadd.f32 0.0, %v659
    %v661 = vpop.f32.mrf.mxu0
    %v662 = vadd.f32 0.0, %v661
    %663 = vdwg.mxu0
    %664 = vmatprep.subr.mxu0 0.0
    %665 = vmatpush1.msra.mxu0 %v414
    %666 = vmatprep.subr.mxu0 0.0
    %667 = vmatpush1.msra.mxu0 %v411
    %668 = vmatprep.subr.mxu0 0.0
    %669 = vmatpush1.msra.mxu0 %v408
    %670 = vmatprep.subr.mxu0 0.0
    %671 = vmatpush1.msra.mxu0 %v405
    %672 = vmatprep.subr.mxu0 0.0
    %673 = vmatpush1.msra.mxu0 %v402
    %674 = vmatprep.subr.mxu0 0.0
    %675 = vmatpush1.msra.mxu0 %v399
    %676 = vmatprep.subr.mxu0 0.0
    %677 = vmatpush1.msra.mxu0 %v396
    %678 = vmatprep.subr.mxu0 0.0
    %679 = vmatpush1.msra.mxu0 %v393
    %680 = vmatprep.subr.mxu0 0.0
    %681 = vmatpush1.msra.mxu0 %v390
    %682 = vmatprep.subr.mxu0 0.0
    %683 = vmatpush1.msra.mxu0 %v387
    %684 = vmatprep.subr.mxu0 0.0
    %685 = vmatpush1.msra.mxu0 %v384
    %686 = vmatprep.subr.mxu0 0.0
    %687 = vmatpush1.msra.mxu0 %v381
    %688 = vmatprep.subr.mxu0 0.0
    %689 = vmatpush1.msra.mxu0 %v378
    %690 = vmatprep.subr.mxu0 0.0
    %691 = vmatpush1.msra.mxu0 %v375
    %692 = vmatprep.subr.mxu0 0.0
    %693 = vmatpush1.msra.mxu0 %v372
    %694 = vmatprep.subr.mxu0 0.0
    %695 = vmatpush1.msra.mxu0 %v369
    %696 = vmatprep.subr.mxu0 0.0
    %697 = vmatpush2.msra.mxu0 0.0
    %698 = vmatprep.subr.mxu0 0.0
    %699 = vmatpush2.msra.mxu0 0.0
    %700 = vmatprep.subr.mxu0 0.0
    %701 = vmatpush2.msra.mxu0 0.0
    %702 = vmatprep.subr.mxu0 0.0
    %703 = vmatpush2.msra.mxu0 0.0
    %704 = vmatprep.subr.mxu0 0.0
    %705 = vmatpush2.msra.mxu0 0.0
    %706 = vmatprep.subr.mxu0 0.0
    %707 = vmatpush2.msra.mxu0 0.0
    %708 = vmatprep.subr.mxu0 0.0
    %709 = vmatpush2.msra.mxu0 0.0
    %710 = vmatprep.subr.mxu0 0.0
    %711 = vmatpush2.msra.mxu0 0.0
    %712 = vmatprep.subr.mxu0 0.0
    %713 = vmatpush2.msra.mxu0 0.0
    %714 = vmatprep.subr.mxu0 0.0
    %715 = vmatpush2.msra.mxu0 0.0
    %716 = vmatprep.subr.mxu0 0.0
    %717 = vmatpush2.msra.mxu0 0.0
    %718 = vmatprep.subr.mxu0 0.0
    %719 = vmatpush2.msra.mxu0 0.0
    %720 = vmatprep.subr.mxu0 0.0
    %721 = vmatpush2.msra.mxu0 0.0
    %722 = vmatprep.subr.mxu0 0.0
    %723 = vmatpush2.msra.mxu0 0.0
    %724 = vmatprep.subr.mxu0 0.0
    %725 = vmatpush2.msra.mxu0 0.0
    %726 = vmatprep.subr.mxu0 0.0
    %727 = vmatpush2.msra.mxu0 0.0
    %728 = vmatprep.mubr.f32.mxu0 0.0
    %729 = vmatmul.mubr.f32.gmra.mxu0 %v588
    %v730 = vpop.f32.mrf.mxu0
    %v731 = vadd.f32 0.0, %v730
    %v732 = vpop.f32.mrf.mxu0
    %733 = vdwg.mxu0
    %v734 = vadd.f32 %v590, %v660
    %v735 = vxor.u32 %v734, 2147483648
    %v736 = vmul.f32 %v735, 1.442695
    %v737 = vpow.pop %v736
    %v738 = vadd.f32 %v737, 1.0
    %v739 = vrcp.pop %v738
    %v740 = vmul.f32 1.0, %v739
    %v741 = vadd.f32 %v591, %v662
    %v742 = vxor.u32 %v741, 2147483648
    %v743 = vmul.f32 %v742, 1.442695
    %v744 = vpow.pop %v743
    %v745 = vadd.f32 %v744, 1.0
    %v746 = vrcp.pop %v745
    %v747 = vmul.f32 1.0, %v746
    %v748 = vadd.f32 %v731, %v420
    %v749 = vmul.f32 %v740, %v748
    %v750 = vadd.f32 %v592, %v749
    %v751 = vtanh.pop %v750
    %v752 = vsub.f32 1.0, %v747
    %v753 = vmul.f32 %v752, %v751
    %v754 = vmul.f32 %v747, %v588
    %v755 = vadd.f32 %v753, %v754
    %s756 = scalar_lea.vmem [#allocation3], 48
    %v757 = vld [vmem:[%s756] sm:$0xff]
    %v758 = vld [vmem:[%s756 + $0x8] sm:$0xff]
    %v759 = vld [vmem:[%s756 + $0x10] sm:$0xff]
    %760 = vmatprep.subr.mxu0 %v413
    %761 = vmatpush1.msra.mxu0 %v412
    %762 = vmatprep.subr.mxu0 %v410
    %763 = vmatpush1.msra.mxu0 %v409
    %764 = vmatprep.subr.mxu0 %v407
    %765 = vmatpush1.msra.mxu0 %v406
    %766 = vmatprep.subr.mxu0 %v404
    %767 = vmatpush1.msra.mxu0 %v403
    %768 = vmatprep.subr.mxu0 %v401
    %769 = vmatpush1.msra.mxu0 %v400
    %770 = vmatprep.subr.mxu0 %v398
    %771 = vmatpush1.msra.mxu0 %v397
    %772 = vmatprep.subr.mxu0 %v395
    %773 = vmatpush1.msra.mxu0 %v394
    %774 = vmatprep.subr.mxu0 %v392
    %775 = vmatpush1.msra.mxu0 %v391
    %776 = vmatprep.subr.mxu0 %v389
    %777 = vmatpush1.msra.mxu0 %v388
    %778 = vmatprep.subr.mxu0 %v386
    %779 = vmatpush1.msra.mxu0 %v385
    %780 = vmatprep.subr.mxu0 %v383
    %781 = vmatpush1.msra.mxu0 %v382
    %782 = vmatprep.subr.mxu0 %v380
    %783 = vmatpush1.msra.mxu0 %v379
    %784 = vmatprep.subr.mxu0 %v377
    %785 = vmatpush1.msra.mxu0 %v376
    %786 = vmatprep.subr.mxu0 %v374
    %787 = vmatpush1.msra.mxu0 %v373
    %788 = vmatprep.subr.mxu0 %v371
    %789 = vmatpush1.msra.mxu0 %v370
    %790 = vmatprep.subr.mxu0 %v368
    %791 = vmatpush1.msra.mxu0 %v367
    %792 = vmatprep.subr.mxu0 0.0
    %793 = vmatpush2.msra.mxu0 0.0
    %794 = vmatprep.subr.mxu0 0.0
    %795 = vmatpush2.msra.mxu0 0.0
    %796 = vmatprep.subr.mxu0 0.0
    %797 = vmatpush2.msra.mxu0 0.0
    %798 = vmatprep.subr.mxu0 0.0
    %799 = vmatpush2.msra.mxu0 0.0
    %800 = vmatprep.subr.mxu0 0.0
    %801 = vmatpush2.msra.mxu0 0.0
    %802 = vmatprep.subr.mxu0 0.0
    %803 = vmatpush2.msra.mxu0 0.0
    %804 = vmatprep.subr.mxu0 0.0
    %805 = vmatpush2.msra.mxu0 0.0
    %806 = vmatprep.subr.mxu0 0.0
    %807 = vmatpush2.msra.mxu0 0.0
    %808 = vmatprep.subr.mxu0 0.0
    %809 = vmatpush2.msra.mxu0 0.0
    %810 = vmatprep.subr.mxu0 0.0
    %811 = vmatpush2.msra.mxu0 0.0
    %812 = vmatprep.subr.mxu0 0.0
    %813 = vmatpush2.msra.mxu0 0.0
    %814 = vmatprep.subr.mxu0 0.0
    %815 = vmatpush2.msra.mxu0 0.0
    %816 = vmatprep.subr.mxu0 0.0
    %817 = vmatpush2.msra.mxu0 0.0
    %818 = vmatprep.subr.mxu0 0.0
    %819 = vmatpush2.msra.mxu0 0.0
    %820 = vmatprep.subr.mxu0 0.0
    %821 = vmatpush2.msra.mxu0 0.0
    %822 = vmatprep.subr.mxu0 0.0
    %823 = vmatpush2.msra.mxu0 0.0
    %824 = vmatprep.mubr.f32.mxu0 0.0
    %825 = vmatmul.mubr.f32.gmra.mxu0 %v755
    %v826 = vpop.f32.mrf.mxu0
    %v827 = vadd.f32 0.0, %v826
    %v828 = vpop.f32.mrf.mxu0
    %v829 = vadd.f32 0.0, %v828
    %830 = vdwg.mxu0
    %831 = vmatprep.subr.mxu0 0.0
    %832 = vmatpush1.msra.mxu0 %v414
    %833 = vmatprep.subr.mxu0 0.0
    %834 = vmatpush1.msra.mxu0 %v411
    %835 = vmatprep.subr.mxu0 0.0
    %836 = vmatpush1.msra.mxu0 %v408
    %837 = vmatprep.subr.mxu0 0.0
    %838 = vmatpush1.msra.mxu0 %v405
    %839 = vmatprep.subr.mxu0 0.0
    %840 = vmatpush1.msra.mxu0 %v402
    %841 = vmatprep.subr.mxu0 0.0
    %842 = vmatpush1.msra.mxu0 %v399
    %843 = vmatprep.subr.mxu0 0.0
    %844 = vmatpush1.msra.mxu0 %v396
    %845 = vmatprep.subr.mxu0 0.0
    %846 = vmatpush1.msra.mxu0 %v393
    %847 = vmatprep.subr.mxu0 0.0
    %848 = vmatpush1.msra.mxu0 %v390
    %849 = vmatprep.subr.mxu0 0.0
    %850 = vmatpush1.msra.mxu0 %v387
    %851 = vmatprep.subr.mxu0 0.0
    %852 = vmatpush1.msra.mxu0 %v384
    %853 = vmatprep.subr.mxu0 0.0
    %854 = vmatpush1.msra.mxu0 %v381
    %855 = vmatprep.subr.mxu0 0.0
    %856 = vmatpush1.msra.mxu0 %v378
    %857 = vmatprep.subr.mxu0 0.0
    %858 = vmatpush1.msra.mxu0 %v375
    %859 = vmatprep.subr.mxu0 0.0
    %860 = vmatpush1.msra.mxu0 %v372
    %861 = vmatprep.subr.mxu0 0.0
    %862 = vmatpush1.msra.mxu0 %v369
    %863 = vmatprep.subr.mxu0 0.0
    %864 = vmatpush2.msra.mxu0 0.0
    %865 = vmatprep.subr.mxu0 0.0
    %866 = vmatpush2.msra.mxu0 0.0
    %867 = vmatprep.subr.mxu0 0.0
    %868 = vmatpush2.msra.mxu0 0.0
    %869 = vmatprep.subr.mxu0 0.0
    %870 = vmatpush2.msra.mxu0 0.0
    %871 = vmatprep.subr.mxu0 0.0
    %872 = vmatpush2.msra.mxu0 0.0
    %873 = vmatprep.subr.mxu0 0.0
    %874 = vmatpush2.msra.mxu0 0.0
    %875 = vmatprep.subr.mxu0 0.0
    %876 = vmatpush2.msra.mxu0 0.0
    %877 = vmatprep.subr.mxu0 0.0
    %878 = vmatpush2.msra.mxu0 0.0
    %879 = vmatprep.subr.mxu0 0.0
    %880 = vmatpush2.msra.mxu0 0.0
    %881 = vmatprep.subr.mxu0 0.0
    %882 = vmatpush2.msra.mxu0 0.0
    %883 = vmatprep.subr.mxu0 0.0
    %884 = vmatpush2.msra.mxu0 0.0
    %885 = vmatprep.subr.mxu0 0.0
    %886 = vmatpush2.msra.mxu0 0.0
    %887 = vmatprep.subr.mxu0 0.0
    %888 = vmatpush2.msra.mxu0 0.0
    %889 = vmatprep.subr.mxu0 0.0
    %890 = vmatpush2.msra.mxu0 0.0
    %891 = vmatprep.subr.mxu0 0.0
    %892 = vmatpush2.msra.mxu0 0.0
    %893 = vmatprep.subr.mxu0 0.0
    %894 = vmatpush2.msra.mxu0 0.0
    %895 = vmatprep.mubr.f32.mxu0 0.0
    %896 = vmatmul.mubr.f32.gmra.mxu0 %v755
    %v897 = vpop.f32.mrf.mxu0
    %v898 = vadd.f32 0.0, %v897
    %v899 = vpop.f32.mrf.mxu0
    %900 = vdwg.mxu0
    %v901 = vadd.f32 %v757, %v827
    %v902 = vxor.u32 %v901, 2147483648
    %v903 = vmul.f32 %v902, 1.442695
    %v904 = vpow.pop %v903
    %v905 = vadd.f32 %v904, 1.0
    %v906 = vrcp.pop %v905
    %v907 = vmul.f32 1.0, %v906
    %v908 = vadd.f32 %v758, %v829
    %v909 = vxor.u32 %v908, 2147483648
    %v910 = vmul.f32 %v909, 1.442695
    %v911 = vpow.pop %v910
    %v912 = vadd.f32 %v911, 1.0
    %v913 = vrcp.pop %v912
    %v914 = vmul.f32 1.0, %v913
    %v915 = vadd.f32 %v898, %v420
    %v916 = vmul.f32 %v907, %v915
    %v917 = vadd.f32 %v759, %v916
    %v918 = vtanh.pop %v917
    %v919 = vsub.f32 1.0, %v914
    %v920 = vmul.f32 %v919, %v918
    %v921 = vmul.f32 %v914, %v755
    %v922 = vadd.f32 %v920, %v921
    %s923 = scalar_lea.vmem [#allocation3], 72
    %v924 = vld [vmem:[%s923] sm:$0xff]
    %v925 = vld [vmem:[%s923 + $0x8] sm:$0xff]
    %v926 = vld [vmem:[%s923 + $0x10] sm:$0xff]
    %927 = vmatprep.subr.mxu0 %v413
    %928 = vmatpush1.msra.mxu0 %v412
    %929 = vmatprep.subr.mxu0 %v410
    %930 = vmatpush1.msra.mxu0 %v409
    %931 = vmatprep.subr.mxu0 %v407
    %932 = vmatpush1.msra.mxu0 %v406
    %933 = vmatprep.subr.mxu0 %v404
    %934 = vmatpush1.msra.mxu0 %v403
    %935 = vmatprep.subr.mxu0 %v401
    %936 = vmatpush1.msra.mxu0 %v400
    %937 = vmatprep.subr.mxu0 %v398
    %938 = vmatpush1.msra.mxu0 %v397
    %939 = vmatprep.subr.mxu0 %v395
    %940 = vmatpush1.msra.mxu0 %v394
    %941 = vmatprep.subr.mxu0 %v392
    %942 = vmatpush1.msra.mxu0 %v391
    %943 = vmatprep.subr.mxu0 %v389
    %944 = vmatpush1.msra.mxu0 %v388
    %945 = vmatprep.subr.mxu0 %v386
    %946 = vmatpush1.msra.mxu0 %v385
    %947 = vmatprep.subr.mxu0 %v383
    %948 = vmatpush1.msra.mxu0 %v382
    %949 = vmatprep.subr.mxu0 %v380
    %950 = vmatpush1.msra.mxu0 %v379
    %951 = vmatprep.subr.mxu0 %v377
    %952 = vmatpush1.msra.mxu0 %v376
    %953 = vmatprep.subr.mxu0 %v374
    %954 = vmatpush1.msra.mxu0 %v373
    %955 = vmatprep.subr.mxu0 %v371
    %956 = vmatpush1.msra.mxu0 %v370
    %957 = vmatprep.subr.mxu0 %v368
    %958 = vmatpush1.msra.mxu0 %v367
    %959 = vmatprep.subr.mxu0 0.0
    %960 = vmatpush2.msra.mxu0 0.0
    %961 = vmatprep.subr.mxu0 0.0
    %962 = vmatpush2.msra.mxu0 0.0
    %963 = vmatprep.subr.mxu0 0.0
    %964 = vmatpush2.msra.mxu0 0.0
    %965 = vmatprep.subr.mxu0 0.0
    %966 = vmatpush2.msra.mxu0 0.0
    %967 = vmatprep.subr.mxu0 0.0
    %968 = vmatpush2.msra.mxu0 0.0
    %969 = vmatprep.subr.mxu0 0.0
    %970 = vmatpush2.msra.mxu0 0.0
    %971 = vmatprep.subr.mxu0 0.0
    %972 = vmatpush2.msra.mxu0 0.0
    %973 = vmatprep.subr.mxu0 0.0
    %974 = vmatpush2.msra.mxu0 0.0
    %975 = vmatprep.subr.mxu0 0.0
    %976 = vmatpush2.msra.mxu0 0.0
    %977 = vmatprep.subr.mxu0 0.0
    %978 = vmatpush2.msra.mxu0 0.0
    %979 = vmatprep.subr.mxu0 0.0
    %980 = vmatpush2.msra.mxu0 0.0
    %981 = vmatprep.subr.mxu0 0.0
    %982 = vmatpush2.msra.mxu0 0.0
    %983 = vmatprep.subr.mxu0 0.0
    %984 = vmatpush2.msra.mxu0 0.0
    %985 = vmatprep.subr.mxu0 0.0
    %986 = vmatpush2.msra.mxu0 0.0
    %987 = vmatprep.subr.mxu0 0.0
    %988 = vmatpush2.msra.mxu0 0.0
    %989 = vmatprep.subr.mxu0 0.0
    %990 = vmatpush2.msra.mxu0 0.0
    %991 = vmatprep.mubr.f32.mxu0 0.0
    %992 = vmatmul.mubr.f32.gmra.mxu0 %v922
    %v993 = vpop.f32.mrf.mxu0
    %v994 = vadd.f32 0.0, %v993
    %v995 = vpop.f32.mrf.mxu0
    %v996 = vadd.f32 0.0, %v995
    %997 = vdwg.mxu0
    %998 = vmatprep.subr.mxu0 0.0
    %999 = vmatpush1.msra.mxu0 %v414
    %1000 = vmatprep.subr.mxu0 0.0
    %1001 = vmatpush1.msra.mxu0 %v411
    %1002 = vmatprep.subr.mxu0 0.0
    %1003 = vmatpush1.msra.mxu0 %v408
    %1004 = vmatprep.subr.mxu0 0.0
    %1005 = vmatpush1.msra.mxu0 %v405
    %1006 = vmatprep.subr.mxu0 0.0
    %1007 = vmatpush1.msra.mxu0 %v402
    %1008 = vmatprep.subr.mxu0 0.0
    %1009 = vmatpush1.msra.mxu0 %v399
    %1010 = vmatprep.subr.mxu0 0.0
    %1011 = vmatpush1.msra.mxu0 %v396
    %1012 = vmatprep.subr.mxu0 0.0
    %1013 = vmatpush1.msra.mxu0 %v393
    %1014 = vmatprep.subr.mxu0 0.0
    %1015 = vmatpush1.msra.mxu0 %v390
    %1016 = vmatprep.subr.mxu0 0.0
    %1017 = vmatpush1.msra.mxu0 %v387
    %1018 = vmatprep.subr.mxu0 0.0
    %1019 = vmatpush1.msra.mxu0 %v384
    %1020 = vmatprep.subr.mxu0 0.0
    %1021 = vmatpush1.msra.mxu0 %v381
    %1022 = vmatprep.subr.mxu0 0.0
    %1023 = vmatpush1.msra.mxu0 %v378
    %1024 = vmatprep.subr.mxu0 0.0
    %1025 = vmatpush1.msra.mxu0 %v375
    %1026 = vmatprep.subr.mxu0 0.0
    %1027 = vmatpush1.msra.mxu0 %v372
    %1028 = vmatprep.subr.mxu0 0.0
    %1029 = vmatpush1.msra.mxu0 %v369
    %1030 = vmatprep.subr.mxu0 0.0
    %1031 = vmatpush2.msra.mxu0 0.0
    %1032 = vmatprep.subr.mxu0 0.0
    %1033 = vmatpush2.msra.mxu0 0.0
    %1034 = vmatprep.subr.mxu0 0.0
    %1035 = vmatpush2.msra.mxu0 0.0
    %1036 = vmatprep.subr.mxu0 0.0
    %1037 = vmatpush2.msra.mxu0 0.0
    %1038 = vmatprep.subr.mxu0 0.0
    %1039 = vmatpush2.msra.mxu0 0.0
    %1040 = vmatprep.subr.mxu0 0.0
    %1041 = vmatpush2.msra.mxu0 0.0
    %1042 = vmatprep.subr.mxu0 0.0
    %1043 = vmatpush2.msra.mxu0 0.0
    %1044 = vmatprep.subr.mxu0 0.0
    %1045 = vmatpush2.msra.mxu0 0.0
    %1046 = vmatprep.subr.mxu0 0.0
    %1047 = vmatpush2.msra.mxu0 0.0
    %1048 = vmatprep.subr.mxu0 0.0
    %1049 = vmatpush2.msra.mxu0 0.0
    %1050 = vmatprep.subr.mxu0 0.0
    %1051 = vmatpush2.msra.mxu0 0.0
    %1052 = vmatprep.subr.mxu0 0.0
    %1053 = vmatpush2.msra.mxu0 0.0
    %1054 = vmatprep.subr.mxu0 0.0
    %1055 = vmatpush2.msra.mxu0 0.0
    %1056 = vmatprep.subr.mxu0 0.0
    %1057 = vmatpush2.msra.mxu0 0.0
    %1058 = vmatprep.subr.mxu0 0.0
    %1059 = vmatpush2.msra.mxu0 0.0
    %1060 = vmatprep.subr.mxu0 0.0
    %1061 = vmatpush2.msra.mxu0 0.0
    %1062 = vmatprep.mubr.f32.mxu0 0.0
    %1063 = vmatmul.mubr.f32.gmra.mxu0 %v922
    %v1064 = vpop.f32.mrf.mxu0
    %v1065 = vadd.f32 0.0, %v1064
    %v1066 = vpop.f32.mrf.mxu0
    %1067 = vdwg.mxu0
    %v1068 = vadd.f32 %v924, %v994
    %v1069 = vxor.u32 %v1068, 2147483648
    %v1070 = vmul.f32 %v1069, 1.442695
    %v1071 = vpow.pop %v1070
    %v1072 = vadd.f32 %v1071, 1.0
    %v1073 = vrcp.pop %v1072
    %v1074 = vmul.f32 1.0, %v1073
    %v1075 = vadd.f32 %v925, %v996
    %v1076 = vxor.u32 %v1075, 2147483648
    %v1077 = vmul.f32 %v1076, 1.442695
    %v1078 = vpow.pop %v1077
    %v1079 = vadd.f32 %v1078, 1.0
    %v1080 = vrcp.pop %v1079
    %v1081 = vmul.f32 1.0, %v1080
    %v1082 = vadd.f32 %v1065, %v420
    %v1083 = vmul.f32 %v1074, %v1082
    %v1084 = vadd.f32 %v926, %v1083
    %v1085 = vtanh.pop %v1084
    %v1086 = vsub.f32 1.0, %v1081
    %v1087 = vmul.f32 %v1086, %v1085
    %v1088 = vmul.f32 %v1081, %v922
    %v1089 = vadd.f32 %v1087, %v1088
    %s1090 = scalar_lea.vmem [#allocation3], 96
    %v1091 = vld [vmem:[%s1090] sm:$0xff]
    %v1092 = vld [vmem:[%s1090 + $0x8] sm:$0xff]
    %v1093 = vld [vmem:[%s1090 + $0x10] sm:$0xff]
    %1094 = vmatprep.subr.mxu0 %v413
    %1095 = vmatpush1.msra.mxu0 %v412
    %1096 = vmatprep.subr.mxu0 %v410
    %1097 = vmatpush1.msra.mxu0 %v409
    %1098 = vmatprep.subr.mxu0 %v407
    %1099 = vmatpush1.msra.mxu0 %v406
    %1100 = vmatprep.subr.mxu0 %v404
    %1101 = vmatpush1.msra.mxu0 %v403
    %1102 = vmatprep.subr.mxu0 %v401
    %1103 = vmatpush1.msra.mxu0 %v400
    %1104 = vmatprep.subr.mxu0 %v398
    %1105 = vmatpush1.msra.mxu0 %v397
    %1106 = vmatprep.subr.mxu0 %v395
    %1107 = vmatpush1.msra.mxu0 %v394
    %1108 = vmatprep.subr.mxu0 %v392
    %1109 = vmatpush1.msra.mxu0 %v391
    %1110 = vmatprep.subr.mxu0 %v389
    %1111 = vmatpush1.msra.mxu0 %v388
    %1112 = vmatprep.subr.mxu0 %v386
    %1113 = vmatpush1.msra.mxu0 %v385
    %1114 = vmatprep.subr.mxu0 %v383
    %1115 = vmatpush1.msra.mxu0 %v382
    %1116 = vmatprep.subr.mxu0 %v380
    %1117 = vmatpush1.msra.mxu0 %v379
    %1118 = vmatprep.subr.mxu0 %v377
    %1119 = vmatpush1.msra.mxu0 %v376
    %1120 = vmatprep.subr.mxu0 %v374
    %1121 = vmatpush1.msra.mxu0 %v373
    %1122 = vmatprep.subr.mxu0 %v371
    %1123 = vmatpush1.msra.mxu0 %v370
    %1124 = vmatprep.subr.mxu0 %v368
    %1125 = vmatpush1.msra.mxu0 %v367
    %1126 = vmatprep.subr.mxu0 0.0
    %1127 = vmatpush2.msra.mxu0 0.0
    %1128 = vmatprep.subr.mxu0 0.0
    %1129 = vmatpush2.msra.mxu0 0.0
    %1130 = vmatprep.subr.mxu0 0.0
    %1131 = vmatpush2.msra.mxu0 0.0
    %1132 = vmatprep.subr.mxu0 0.0
    %1133 = vmatpush2.msra.mxu0 0.0
    %1134 = vmatprep.subr.mxu0 0.0
    %1135 = vmatpush2.msra.mxu0 0.0
    %1136 = vmatprep.subr.mxu0 0.0
    %1137 = vmatpush2.msra.mxu0 0.0
    %1138 = vmatprep.subr.mxu0 0.0
    %1139 = vmatpush2.msra.mxu0 0.0
    %1140 = vmatprep.subr.mxu0 0.0
    %1141 = vmatpush2.msra.mxu0 0.0
    %1142 = vmatprep.subr.mxu0 0.0
    %1143 = vmatpush2.msra.mxu0 0.0
    %1144 = vmatprep.subr.mxu0 0.0
    %1145 = vmatpush2.msra.mxu0 0.0
    %1146 = vmatprep.subr.mxu0 0.0
    %1147 = vmatpush2.msra.mxu0 0.0
    %1148 = vmatprep.subr.mxu0 0.0
    %1149 = vmatpush2.msra.mxu0 0.0
    %1150 = vmatprep.subr.mxu0 0.0
    %1151 = vmatpush2.msra.mxu0 0.0
    %1152 = vmatprep.subr.mxu0 0.0
    %1153 = vmatpush2.msra.mxu0 0.0
    %1154 = vmatprep.subr.mxu0 0.0
    %1155 = vmatpush2.msra.mxu0 0.0
    %1156 = vmatprep.subr.mxu0 0.0
    %1157 = vmatpush2.msra.mxu0 0.0
    %1158 = vmatprep.mubr.f32.mxu0 0.0
    %1159 = vmatmul.mubr.f32.gmra.mxu0 %v1089
    %v1160 = vpop.f32.mrf.mxu0
    %v1161 = vadd.f32 0.0, %v1160
    %v1162 = vpop.f32.mrf.mxu0
    %v1163 = vadd.f32 0.0, %v1162
    %1164 = vdwg.mxu0
    %1165 = vmatprep.subr.mxu0 0.0
    %1166 = vmatpush1.msra.mxu0 %v414
    %1167 = vmatprep.subr.mxu0 0.0
    %1168 = vmatpush1.msra.mxu0 %v411
    %1169 = vmatprep.subr.mxu0 0.0
    %1170 = vmatpush1.msra.mxu0 %v408
    %1171 = vmatprep.subr.mxu0 0.0
    %1172 = vmatpush1.msra.mxu0 %v405
    %1173 = vmatprep.subr.mxu0 0.0
    %1174 = vmatpush1.msra.mxu0 %v402
    %1175 = vmatprep.subr.mxu0 0.0
    %1176 = vmatpush1.msra.mxu0 %v399
    %1177 = vmatprep.subr.mxu0 0.0
    %1178 = vmatpush1.msra.mxu0 %v396
    %1179 = vmatprep.subr.mxu0 0.0
    %1180 = vmatpush1.msra.mxu0 %v393
    %1181 = vmatprep.subr.mxu0 0.0
    %1182 = vmatpush1.msra.mxu0 %v390
    %1183 = vmatprep.subr.mxu0 0.0
    %1184 = vmatpush1.msra.mxu0 %v387
    %1185 = vmatprep.subr.mxu0 0.0
    %1186 = vmatpush1.msra.mxu0 %v384
    %1187 = vmatprep.subr.mxu0 0.0
    %1188 = vmatpush1.msra.mxu0 %v381
    %1189 = vmatprep.subr.mxu0 0.0
    %1190 = vmatpush1.msra.mxu0 %v378
    %1191 = vmatprep.subr.mxu0 0.0
    %1192 = vmatpush1.msra.mxu0 %v375
    %1193 = vmatprep.subr.mxu0 0.0
    %1194 = vmatpush1.msra.mxu0 %v372
    %1195 = vmatprep.subr.mxu0 0.0
    %1196 = vmatpush1.msra.mxu0 %v369
    %1197 = vmatprep.subr.mxu0 0.0
    %1198 = vmatpush2.msra.mxu0 0.0
    %1199 = vmatprep.subr.mxu0 0.0
    %1200 = vmatpush2.msra.mxu0 0.0
    %1201 = vmatprep.subr.mxu0 0.0
    %1202 = vmatpush2.msra.mxu0 0.0
    %1203 = vmatprep.subr.mxu0 0.0
    %1204 = vmatpush2.msra.mxu0 0.0
    %1205 = vmatprep.subr.mxu0 0.0
    %1206 = vmatpush2.msra.mxu0 0.0
    %1207 = vmatprep.subr.mxu0 0.0
    %1208 = vmatpush2.msra.mxu0 0.0
    %1209 = vmatprep.subr.mxu0 0.0
    %1210 = vmatpush2.msra.mxu0 0.0
    %1211 = vmatprep.subr.mxu0 0.0
    %1212 = vmatpush2.msra.mxu0 0.0
    %1213 = vmatprep.subr.mxu0 0.0
    %1214 = vmatpush2.msra.mxu0 0.0
    %1215 = vmatprep.subr.mxu0 0.0
    %1216 = vmatpush2.msra.mxu0 0.0
    %1217 = vmatprep.subr.mxu0 0.0
    %1218 = vmatpush2.msra.mxu0 0.0
    %1219 = vmatprep.subr.mxu0 0.0
    %1220 = vmatpush2.msra.mxu0 0.0
    %1221 = vmatprep.subr.mxu0 0.0
    %1222 = vmatpush2.msra.mxu0 0.0
    %1223 = vmatprep.subr.mxu0 0.0
    %1224 = vmatpush2.msra.mxu0 0.0
    %1225 = vmatprep.subr.mxu0 0.0
    %1226 = vmatpush2.msra.mxu0 0.0
    %1227 = vmatprep.subr.mxu0 0.0
    %1228 = vmatpush2.msra.mxu0 0.0
    %1229 = vmatprep.mubr.f32.mxu0 0.0
    %1230 = vmatmul.mubr.f32.gmra.mxu0 %v1089
    %v1231 = vpop.f32.mrf.mxu0
    %v1232 = vadd.f32 0.0, %v1231
    %v1233 = vpop.f32.mrf.mxu0
    %1234 = vdwg.mxu0
    %v1235 = vadd.f32 %v1091, %v1161
    %v1236 = vxor.u32 %v1235, 2147483648
    %v1237 = vmul.f32 %v1236, 1.442695
    %v1238 = vpow.pop %v1237
    %v1239 = vadd.f32 %v1238, 1.0
    %v1240 = vrcp.pop %v1239
    %v1241 = vmul.f32 1.0, %v1240
    %v1242 = vadd.f32 %v1092, %v1163
    %v1243 = vxor.u32 %v1242, 2147483648
    %v1244 = vmul.f32 %v1243, 1.442695
    %v1245 = vpow.pop %v1244
    %v1246 = vadd.f32 %v1245, 1.0
    %v1247 = vrcp.pop %v1246
    %v1248 = vmul.f32 1.0, %v1247
    %v1249 = vadd.f32 %v1232, %v420
    %v1250 = vmul.f32 %v1241, %v1249
    %v1251 = vadd.f32 %v1093, %v1250
    %v1252 = vtanh.pop %v1251
    %v1253 = vsub.f32 1.0, %v1248
    %v1254 = vmul.f32 %v1253, %v1252
    %v1255 = vmul.f32 %v1248, %v1089
    %v1256 = vadd.f32 %v1254, %v1255
    %s1257 = scalar_lea.vmem [#allocation3], 120
    %v1258 = vld [vmem:[%s1257] sm:$0xff]
    %v1259 = vld [vmem:[%s1257 + $0x8] sm:$0xff]
    %v1260 = vld [vmem:[%s1257 + $0x10] sm:$0xff]
    %1261 = vmatprep.subr.mxu0 %v413
    %1262 = vmatpush1.msra.mxu0 %v412
    %1263 = vmatprep.subr.mxu0 %v410
    %1264 = vmatpush1.msra.mxu0 %v409
    %1265 = vmatprep.subr.mxu0 %v407
    %1266 = vmatpush1.msra.mxu0 %v406
    %1267 = vmatprep.subr.mxu0 %v404
    %1268 = vmatpush1.msra.mxu0 %v403
    %1269 = vmatprep.subr.mxu0 %v401
    %1270 = vmatpush1.msra.mxu0 %v400
    %1271 = vmatprep.subr.mxu0 %v398
    %1272 = vmatpush1.msra.mxu0 %v397
    %1273 = vmatprep.subr.mxu0 %v395
    %1274 = vmatpush1.msra.mxu0 %v394
    %1275 = vmatprep.subr.mxu0 %v392
    %1276 = vmatpush1.msra.mxu0 %v391
    %1277 = vmatprep.subr.mxu0 %v389
    %1278 = vmatpush1.msra.mxu0 %v388
    %1279 = vmatprep.subr.mxu0 %v386
    %1280 = vmatpush1.msra.mxu0 %v385
    %1281 = vmatprep.subr.mxu0 %v383
    %1282 = vmatpush1.msra.mxu0 %v382
    %1283 = vmatprep.subr.mxu0 %v380
    %1284 = vmatpush1.msra.mxu0 %v379
    %1285 = vmatprep.subr.mxu0 %v377
    %1286 = vmatpush1.msra.mxu0 %v376
    %1287 = vmatprep.subr.mxu0 %v374
    %1288 = vmatpush1.msra.mxu0 %v373
    %1289 = vmatprep.subr.mxu0 %v371
    %1290 = vmatpush1.msra.mxu0 %v370
    %1291 = vmatprep.subr.mxu0 %v368
    %1292 = vmatpush1.msra.mxu0 %v367
    %1293 = vmatprep.subr.mxu0 0.0
    %1294 = vmatpush2.msra.mxu0 0.0
    %1295 = vmatprep.subr.mxu0 0.0
    %1296 = vmatpush2.msra.mxu0 0.0
    %1297 = vmatprep.subr.mxu0 0.0
    %1298 = vmatpush2.msra.mxu0 0.0
    %1299 = vmatprep.subr.mxu0 0.0
    %1300 = vmatpush2.msra.mxu0 0.0
    %1301 = vmatprep.subr.mxu0 0.0
    %1302 = vmatpush2.msra.mxu0 0.0
    %1303 = vmatprep.subr.mxu0 0.0
    %1304 = vmatpush2.msra.mxu0 0.0
    %1305 = vmatprep.subr.mxu0 0.0
    %1306 = vmatpush2.msra.mxu0 0.0
    %1307 = vmatprep.subr.mxu0 0.0
    %1308 = vmatpush2.msra.mxu0 0.0
    %1309 = vmatprep.subr.mxu0 0.0
    %1310 = vmatpush2.msra.mxu0 0.0
    %1311 = vmatprep.subr.mxu0 0.0
    %1312 = vmatpush2.msra.mxu0 0.0
    %1313 = vmatprep.subr.mxu0 0.0
    %1314 = vmatpush2.msra.mxu0 0.0
    %1315 = vmatprep.subr.mxu0 0.0
    %1316 = vmatpush2.msra.mxu0 0.0
    %1317 = vmatprep.subr.mxu0 0.0
    %1318 = vmatpush2.msra.mxu0 0.0
    %1319 = vmatprep.subr.mxu0 0.0
    %1320 = vmatpush2.msra.mxu0 0.0
    %1321 = vmatprep.subr.mxu0 0.0
    %1322 = vmatpush2.msra.mxu0 0.0
    %1323 = vmatprep.subr.mxu0 0.0
    %1324 = vmatpush2.msra.mxu0 0.0
    %1325 = vmatprep.mubr.f32.mxu0 0.0
    %1326 = vmatmul.mubr.f32.gmra.mxu0 %v1256
    %v1327 = vpop.f32.mrf.mxu0
    %v1328 = vadd.f32 0.0, %v1327
    %v1329 = vpop.f32.mrf.mxu0
    %v1330 = vadd.f32 0.0, %v1329
    %1331 = vdwg.mxu0
    %1332 = vmatprep.subr.mxu0 0.0
    %1333 = vmatpush1.msra.mxu0 %v414
    %1334 = vmatprep.subr.mxu0 0.0
    %1335 = vmatpush1.msra.mxu0 %v411
    %1336 = vmatprep.subr.mxu0 0.0
    %1337 = vmatpush1.msra.mxu0 %v408
    %1338 = vmatprep.subr.mxu0 0.0
    %1339 = vmatpush1.msra.mxu0 %v405
    %1340 = vmatprep.subr.mxu0 0.0
    %1341 = vmatpush1.msra.mxu0 %v402
    %1342 = vmatprep.subr.mxu0 0.0
    %1343 = vmatpush1.msra.mxu0 %v399
    %1344 = vmatprep.subr.mxu0 0.0
    %1345 = vmatpush1.msra.mxu0 %v396
    %1346 = vmatprep.subr.mxu0 0.0
    %1347 = vmatpush1.msra.mxu0 %v393
    %1348 = vmatprep.subr.mxu0 0.0
    %1349 = vmatpush1.msra.mxu0 %v390
    %1350 = vmatprep.subr.mxu0 0.0
    %1351 = vmatpush1.msra.mxu0 %v387
    %1352 = vmatprep.subr.mxu0 0.0
    %1353 = vmatpush1.msra.mxu0 %v384
    %1354 = vmatprep.subr.mxu0 0.0
    %1355 = vmatpush1.msra.mxu0 %v381
    %1356 = vmatprep.subr.mxu0 0.0
    %1357 = vmatpush1.msra.mxu0 %v378
    %1358 = vmatprep.subr.mxu0 0.0
    %1359 = vmatpush1.msra.mxu0 %v375
    %1360 = vmatprep.subr.mxu0 0.0
    %1361 = vmatpush1.msra.mxu0 %v372
    %1362 = vmatprep.subr.mxu0 0.0
    %1363 = vmatpush1.msra.mxu0 %v369
    %1364 = vmatprep.subr.mxu0 0.0
    %1365 = vmatpush2.msra.mxu0 0.0
    %1366 = vmatprep.subr.mxu0 0.0
    %1367 = vmatpush2.msra.mxu0 0.0
    %1368 = vmatprep.subr.mxu0 0.0
    %1369 = vmatpush2.msra.mxu0 0.0
    %1370 = vmatprep.subr.mxu0 0.0
    %1371 = vmatpush2.msra.mxu0 0.0
    %1372 = vmatprep.subr.mxu0 0.0
    %1373 = vmatpush2.msra.mxu0 0.0
    %1374 = vmatprep.subr.mxu0 0.0
    %1375 = vmatpush2.msra.mxu0 0.0
    %1376 = vmatprep.subr.mxu0 0.0
    %1377 = vmatpush2.msra.mxu0 0.0
    %1378 = vmatprep.subr.mxu0 0.0
    %1379 = vmatpush2.msra.mxu0 0.0
    %1380 = vmatprep.subr.mxu0 0.0
    %1381 = vmatpush2.msra.mxu0 0.0
    %1382 = vmatprep.subr.mxu0 0.0
    %1383 = vmatpush2.msra.mxu0 0.0
    %1384 = vmatprep.subr.mxu0 0.0
    %1385 = vmatpush2.msra.mxu0 0.0
    %1386 = vmatprep.subr.mxu0 0.0
    %1387 = vmatpush2.msra.mxu0 0.0
    %1388 = vmatprep.subr.mxu0 0.0
    %1389 = vmatpush2.msra.mxu0 0.0
    %1390 = vmatprep.subr.mxu0 0.0
    %1391 = vmatpush2.msra.mxu0 0.0
    %1392 = vmatprep.subr.mxu0 0.0
    %1393 = vmatpush2.msra.mxu0 0.0
    %1394 = vmatprep.subr.mxu0 0.0
    %1395 = vmatpush2.msra.mxu0 0.0
    %1396 = vmatprep.mubr.f32.mxu0 0.0
    %1397 = vmatmul.mubr.f32.gmra.mxu0 %v1256
    %v1398 = vpop.f32.mrf.mxu0
    %v1399 = vadd.f32 0.0, %v1398
    %v1400 = vpop.f32.mrf.mxu0
    %1401 = vdwg.mxu0
    %v1402 = vadd.f32 %v1258, %v1328
    %v1403 = vxor.u32 %v1402, 2147483648
    %v1404 = vmul.f32 %v1403, 1.442695
    %v1405 = vpow.pop %v1404
    %v1406 = vadd.f32 %v1405, 1.0
    %v1407 = vrcp.pop %v1406
    %v1408 = vmul.f32 1.0, %v1407
    %v1409 = vadd.f32 %v1259, %v1330
    %v1410 = vxor.u32 %v1409, 2147483648
    %v1411 = vmul.f32 %v1410, 1.442695
    %v1412 = vpow.pop %v1411
    %v1413 = vadd.f32 %v1412, 1.0
    %v1414 = vrcp.pop %v1413
    %v1415 = vmul.f32 1.0, %v1414
    %v1416 = vadd.f32 %v1399, %v420
    %v1417 = vmul.f32 %v1408, %v1416
    %v1418 = vadd.f32 %v1260, %v1417
    %v1419 = vtanh.pop %v1418
    %v1420 = vsub.f32 1.0, %v1415
    %v1421 = vmul.f32 %v1420, %v1419
    %v1422 = vmul.f32 %v1415, %v1256
    %v1423 = vadd.f32 %v1421, %v1422
    %s1424 = scalar_lea.vmem [#allocation3], 144
    %v1425 = vld [vmem:[%s1424] sm:$0xff]
    %v1426 = vld [vmem:[%s1424 + $0x8] sm:$0xff]
    %v1427 = vld [vmem:[%s1424 + $0x10] sm:$0xff]
    %1428 = vmatprep.subr.mxu0 %v413
    %1429 = vmatpush1.msra.mxu0 %v412
    %1430 = vmatprep.subr.mxu0 %v410
    %1431 = vmatpush1.msra.mxu0 %v409
    %1432 = vmatprep.subr.mxu0 %v407
    %1433 = vmatpush1.msra.mxu0 %v406
    %1434 = vmatprep.subr.mxu0 %v404
    %1435 = vmatpush1.msra.mxu0 %v403
    %1436 = vmatprep.subr.mxu0 %v401
    %1437 = vmatpush1.msra.mxu0 %v400
    %1438 = vmatprep.subr.mxu0 %v398
    %1439 = vmatpush1.msra.mxu0 %v397
    %1440 = vmatprep.subr.mxu0 %v395
    %1441 = vmatpush1.msra.mxu0 %v394
    %1442 = vmatprep.subr.mxu0 %v392
    %1443 = vmatpush1.msra.mxu0 %v391
    %1444 = vmatprep.subr.mxu0 %v389
    %1445 = vmatpush1.msra.mxu0 %v388
    %1446 = vmatprep.subr.mxu0 %v386
    %1447 = vmatpush1.msra.mxu0 %v385
    %1448 = vmatprep.subr.mxu0 %v383
    %1449 = vmatpush1.msra.mxu0 %v382
    %1450 = vmatprep.subr.mxu0 %v380
    %1451 = vmatpush1.msra.mxu0 %v379
    %1452 = vmatprep.subr.mxu0 %v377
    %1453 = vmatpush1.msra.mxu0 %v376
    %1454 = vmatprep.subr.mxu0 %v374
    %1455 = vmatpush1.msra.mxu0 %v373
    %1456 = vmatprep.subr.mxu0 %v371
    %1457 = vmatpush1.msra.mxu0 %v370
    %1458 = vmatprep.subr.mxu0 %v368
    %1459 = vmatpush1.msra.mxu0 %v367
    %1460 = vmatprep.subr.mxu0 0.0
    %1461 = vmatpush2.msra.mxu0 0.0
    %1462 = vmatprep.subr.mxu0 0.0
    %1463 = vmatpush2.msra.mxu0 0.0
    %1464 = vmatprep.subr.mxu0 0.0
    %1465 = vmatpush2.msra.mxu0 0.0
    %1466 = vmatprep.subr.mxu0 0.0
    %1467 = vmatpush2.msra.mxu0 0.0
    %1468 = vmatprep.subr.mxu0 0.0
    %1469 = vmatpush2.msra.mxu0 0.0
    %1470 = vmatprep.subr.mxu0 0.0
    %1471 = vmatpush2.msra.mxu0 0.0
    %1472 = vmatprep.subr.mxu0 0.0
    %1473 = vmatpush2.msra.mxu0 0.0
    %1474 = vmatprep.subr.mxu0 0.0
    %1475 = vmatpush2.msra.mxu0 0.0
    %1476 = vmatprep.subr.mxu0 0.0
    %1477 = vmatpush2.msra.mxu0 0.0
    %1478 = vmatprep.subr.mxu0 0.0
    %1479 = vmatpush2.msra.mxu0 0.0
    %1480 = vmatprep.subr.mxu0 0.0
    %1481 = vmatpush2.msra.mxu0 0.0
    %1482 = vmatprep.subr.mxu0 0.0
    %1483 = vmatpush2.msra.mxu0 0.0
    %1484 = vmatprep.subr.mxu0 0.0
    %1485 = vmatpush2.msra.mxu0 0.0
    %1486 = vmatprep.subr.mxu0 0.0
    %1487 = vmatpush2.msra.mxu0 0.0
    %1488 = vmatprep.subr.mxu0 0.0
    %1489 = vmatpush2.msra.mxu0 0.0
    %1490 = vmatprep.subr.mxu0 0.0
    %1491 = vmatpush2.msra.mxu0 0.0
    %1492 = vmatprep.mubr.f32.mxu0 0.0
    %1493 = vmatmul.mubr.f32.gmra.mxu0 %v1423
    %v1494 = vpop.f32.mrf.mxu0
    %v1495 = vadd.f32 0.0, %v1494
    %v1496 = vpop.f32.mrf.mxu0
    %v1497 = vadd.f32 0.0, %v1496
    %1498 = vdwg.mxu0
    %1499 = vmatprep.subr.mxu0 0.0
    %1500 = vmatpush1.msra.mxu0 %v414
    %1501 = vmatprep.subr.mxu0 0.0
    %1502 = vmatpush1.msra.mxu0 %v411
    %1503 = vmatprep.subr.mxu0 0.0
    %1504 = vmatpush1.msra.mxu0 %v408
    %1505 = vmatprep.subr.mxu0 0.0
    %1506 = vmatpush1.msra.mxu0 %v405
    %1507 = vmatprep.subr.mxu0 0.0
    %1508 = vmatpush1.msra.mxu0 %v402
    %1509 = vmatprep.subr.mxu0 0.0
    %1510 = vmatpush1.msra.mxu0 %v399
    %1511 = vmatprep.subr.mxu0 0.0
    %1512 = vmatpush1.msra.mxu0 %v396
    %1513 = vmatprep.subr.mxu0 0.0
    %1514 = vmatpush1.msra.mxu0 %v393
    %1515 = vmatprep.subr.mxu0 0.0
    %1516 = vmatpush1.msra.mxu0 %v390
    %1517 = vmatprep.subr.mxu0 0.0
    %1518 = vmatpush1.msra.mxu0 %v387
    %1519 = vmatprep.subr.mxu0 0.0
    %1520 = vmatpush1.msra.mxu0 %v384
    %1521 = vmatprep.subr.mxu0 0.0
    %1522 = vmatpush1.msra.mxu0 %v381
    %1523 = vmatprep.subr.mxu0 0.0
    %1524 = vmatpush1.msra.mxu0 %v378
    %1525 = vmatprep.subr.mxu0 0.0
    %1526 = vmatpush1.msra.mxu0 %v375
    %1527 = vmatprep.subr.mxu0 0.0
    %1528 = vmatpush1.msra.mxu0 %v372
    %1529 = vmatprep.subr.mxu0 0.0
    %1530 = vmatpush1.msra.mxu0 %v369
    %1531 = vmatprep.subr.mxu0 0.0
    %1532 = vmatpush2.msra.mxu0 0.0
    %1533 = vmatprep.subr.mxu0 0.0
    %1534 = vmatpush2.msra.mxu0 0.0
    %1535 = vmatprep.subr.mxu0 0.0
    %1536 = vmatpush2.msra.mxu0 0.0
    %1537 = vmatprep.subr.mxu0 0.0
    %1538 = vmatpush2.msra.mxu0 0.0
    %1539 = vmatprep.subr.mxu0 0.0
    %1540 = vmatpush2.msra.mxu0 0.0
    %1541 = vmatprep.subr.mxu0 0.0
    %1542 = vmatpush2.msra.mxu0 0.0
    %1543 = vmatprep.subr.mxu0 0.0
    %1544 = vmatpush2.msra.mxu0 0.0
    %1545 = vmatprep.subr.mxu0 0.0
    %1546 = vmatpush2.msra.mxu0 0.0
    %1547 = vmatprep.subr.mxu0 0.0
    %1548 = vmatpush2.msra.mxu0 0.0
    %1549 = vmatprep.subr.mxu0 0.0
    %1550 = vmatpush2.msra.mxu0 0.0
    %1551 = vmatprep.subr.mxu0 0.0
    %1552 = vmatpush2.msra.mxu0 0.0
    %1553 = vmatprep.subr.mxu0 0.0
    %1554 = vmatpush2.msra.mxu0 0.0
    %1555 = vmatprep.subr.mxu0 0.0
    %1556 = vmatpush2.msra.mxu0 0.0
    %1557 = vmatprep.subr.mxu0 0.0
    %1558 = vmatpush2.msra.mxu0 0.0
    %1559 = vmatprep.subr.mxu0 0.0
    %1560 = vmatpush2.msra.mxu0 0.0
    %1561 = vmatprep.subr.mxu0 0.0
    %1562 = vmatpush2.msra.mxu0 0.0
    %1563 = vmatprep.mubr.f32.mxu0 0.0
    %1564 = vmatmul.mubr.f32.gmra.mxu0 %v1423
    %v1565 = vpop.f32.mrf.mxu0
    %v1566 = vadd.f32 0.0, %v1565
    %v1567 = vpop.f32.mrf.mxu0
    %1568 = vdwg.mxu0
    %v1569 = vadd.f32 %v1425, %v1495
    %v1570 = vxor.u32 %v1569, 2147483648
    %v1571 = vmul.f32 %v1570, 1.442695
    %v1572 = vpow.pop %v1571
    %v1573 = vadd.f32 %v1572, 1.0
    %v1574 = vrcp.pop %v1573
    %v1575 = vmul.f32 1.0, %v1574
    %v1576 = vadd.f32 %v1426, %v1497
    %v1577 = vxor.u32 %v1576, 2147483648
    %v1578 = vmul.f32 %v1577, 1.442695
    %v1579 = vpow.pop %v1578
    %v1580 = vadd.f32 %v1579, 1.0
    %v1581 = vrcp.pop %v1580
    %v1582 = vmul.f32 1.0, %v1581
    %v1583 = vadd.f32 %v1566, %v420
    %v1584 = vmul.f32 %v1575, %v1583
    %v1585 = vadd.f32 %v1427, %v1584
    %v1586 = vtanh.pop %v1585
    %v1587 = vsub.f32 1.0, %v1582
    %v1588 = vmul.f32 %v1587, %v1586
    %v1589 = vmul.f32 %v1582, %v1423
    %v1590 = vadd.f32 %v1588, %v1589
    %s1591 = scalar_lea.vmem [#allocation3], 168
    %v1592 = vld [vmem:[%s1591] sm:$0xff]
    %v1593 = vld [vmem:[%s1591 + $0x8] sm:$0xff]
    %v1594 = vld [vmem:[%s1591 + $0x10] sm:$0xff]
    %1595 = vmatprep.subr.mxu0 %v413
    %1596 = vmatpush1.msra.mxu0 %v412
    %1597 = vmatprep.subr.mxu0 %v410
    %1598 = vmatpush1.msra.mxu0 %v409
    %1599 = vmatprep.subr.mxu0 %v407
    %1600 = vmatpush1.msra.mxu0 %v406
    %1601 = vmatprep.subr.mxu0 %v404
    %1602 = vmatpush1.msra.mxu0 %v403
    %1603 = vmatprep.subr.mxu0 %v401
    %1604 = vmatpush1.msra.mxu0 %v400
    %1605 = vmatprep.subr.mxu0 %v398
    %1606 = vmatpush1.msra.mxu0 %v397
    %1607 = vmatprep.subr.mxu0 %v395
    %1608 = vmatpush1.msra.mxu0 %v394
    %1609 = vmatprep.subr.mxu0 %v392
    %1610 = vmatpush1.msra.mxu0 %v391
    %1611 = vmatprep.subr.mxu0 %v389
    %1612 = vmatpush1.msra.mxu0 %v388
    %1613 = vmatprep.subr.mxu0 %v386
    %1614 = vmatpush1.msra.mxu0 %v385
    %1615 = vmatprep.subr.mxu0 %v383
    %1616 = vmatpush1.msra.mxu0 %v382
    %1617 = vmatprep.subr.mxu0 %v380
    %1618 = vmatpush1.msra.mxu0 %v379
    %1619 = vmatprep.subr.mxu0 %v377
    %1620 = vmatpush1.msra.mxu0 %v376
    %1621 = vmatprep.subr.mxu0 %v374
    %1622 = vmatpush1.msra.mxu0 %v373
    %1623 = vmatprep.subr.mxu0 %v371
    %1624 = vmatpush1.msra.mxu0 %v370
    %1625 = vmatprep.subr.mxu0 %v368
    %1626 = vmatpush1.msra.mxu0 %v367
    %1627 = vmatprep.subr.mxu0 0.0
    %1628 = vmatpush2.msra.mxu0 0.0
    %1629 = vmatprep.subr.mxu0 0.0
    %1630 = vmatpush2.msra.mxu0 0.0
    %1631 = vmatprep.subr.mxu0 0.0
    %1632 = vmatpush2.msra.mxu0 0.0
    %1633 = vmatprep.subr.mxu0 0.0
    %1634 = vmatpush2.msra.mxu0 0.0
    %1635 = vmatprep.subr.mxu0 0.0
    %1636 = vmatpush2.msra.mxu0 0.0
    %1637 = vmatprep.subr.mxu0 0.0
    %1638 = vmatpush2.msra.mxu0 0.0
    %1639 = vmatprep.subr.mxu0 0.0
    %1640 = vmatpush2.msra.mxu0 0.0
    %1641 = vmatprep.subr.mxu0 0.0
    %1642 = vmatpush2.msra.mxu0 0.0
    %1643 = vmatprep.subr.mxu0 0.0
    %1644 = vmatpush2.msra.mxu0 0.0
    %1645 = vmatprep.subr.mxu0 0.0
    %1646 = vmatpush2.msra.mxu0 0.0
    %1647 = vmatprep.subr.mxu0 0.0
    %1648 = vmatpush2.msra.mxu0 0.0
    %1649 = vmatprep.subr.mxu0 0.0
    %1650 = vmatpush2.msra.mxu0 0.0
    %1651 = vmatprep.subr.mxu0 0.0
    %1652 = vmatpush2.msra.mxu0 0.0
    %1653 = vmatprep.subr.mxu0 0.0
    %1654 = vmatpush2.msra.mxu0 0.0
    %1655 = vmatprep.subr.mxu0 0.0
    %1656 = vmatpush2.msra.mxu0 0.0
    %1657 = vmatprep.subr.mxu0 0.0
    %1658 = vmatpush2.msra.mxu0 0.0
    %1659 = vmatprep.mubr.f32.mxu0 0.0
    %1660 = vmatmul.mubr.f32.gmra.mxu0 %v1590
    %v1661 = vpop.f32.mrf.mxu0
    %v1662 = vadd.f32 0.0, %v1661
    %v1663 = vpop.f32.mrf.mxu0
    %v1664 = vadd.f32 0.0, %v1663
    %1665 = vdwg.mxu0
    %1666 = vmatprep.subr.mxu0 0.0
    %1667 = vmatpush1.msra.mxu0 %v414
    %1668 = vmatprep.subr.mxu0 0.0
    %1669 = vmatpush1.msra.mxu0 %v411
    %1670 = vmatprep.subr.mxu0 0.0
    %1671 = vmatpush1.msra.mxu0 %v408
    %1672 = vmatprep.subr.mxu0 0.0
    %1673 = vmatpush1.msra.mxu0 %v405
    %1674 = vmatprep.subr.mxu0 0.0
    %1675 = vmatpush1.msra.mxu0 %v402
    %1676 = vmatprep.subr.mxu0 0.0
    %1677 = vmatpush1.msra.mxu0 %v399
    %1678 = vmatprep.subr.mxu0 0.0
    %1679 = vmatpush1.msra.mxu0 %v396
    %1680 = vmatprep.subr.mxu0 0.0
    %1681 = vmatpush1.msra.mxu0 %v393
    %1682 = vmatprep.subr.mxu0 0.0
    %1683 = vmatpush1.msra.mxu0 %v390
    %1684 = vmatprep.subr.mxu0 0.0
    %1685 = vmatpush1.msra.mxu0 %v387
    %1686 = vmatprep.subr.mxu0 0.0
    %1687 = vmatpush1.msra.mxu0 %v384
    %1688 = vmatprep.subr.mxu0 0.0
    %1689 = vmatpush1.msra.mxu0 %v381
    %1690 = vmatprep.subr.mxu0 0.0
    %1691 = vmatpush1.msra.mxu0 %v378
    %1692 = vmatprep.subr.mxu0 0.0
    %1693 = vmatpush1.msra.mxu0 %v375
    %1694 = vmatprep.subr.mxu0 0.0
    %1695 = vmatpush1.msra.mxu0 %v372
    %1696 = vmatprep.subr.mxu0 0.0
    %1697 = vmatpush1.msra.mxu0 %v369
    %1698 = vmatprep.subr.mxu0 0.0
    %1699 = vmatpush2.msra.mxu0 0.0
    %1700 = vmatprep.subr.mxu0 0.0
    %1701 = vmatpush2.msra.mxu0 0.0
    %1702 = vmatprep.subr.mxu0 0.0
    %1703 = vmatpush2.msra.mxu0 0.0
    %1704 = vmatprep.subr.mxu0 0.0
    %1705 = vmatpush2.msra.mxu0 0.0
    %1706 = vmatprep.subr.mxu0 0.0
    %1707 = vmatpush2.msra.mxu0 0.0
    %1708 = vmatprep.subr.mxu0 0.0
    %1709 = vmatpush2.msra.mxu0 0.0
    %1710 = vmatprep.subr.mxu0 0.0
    %1711 = vmatpush2.msra.mxu0 0.0
    %1712 = vmatprep.subr.mxu0 0.0
    %1713 = vmatpush2.msra.mxu0 0.0
    %1714 = vmatprep.subr.mxu0 0.0
    %1715 = vmatpush2.msra.mxu0 0.0
    %1716 = vmatprep.subr.mxu0 0.0
    %1717 = vmatpush2.msra.mxu0 0.0
    %1718 = vmatprep.subr.mxu0 0.0
    %1719 = vmatpush2.msra.mxu0 0.0
    %1720 = vmatprep.subr.mxu0 0.0
    %1721 = vmatpush2.msra.mxu0 0.0
    %1722 = vmatprep.subr.mxu0 0.0
    %1723 = vmatpush2.msra.mxu0 0.0
    %1724 = vmatprep.subr.mxu0 0.0
    %1725 = vmatpush2.msra.mxu0 0.0
    %1726 = vmatprep.subr.mxu0 0.0
    %1727 = vmatpush2.msra.mxu0 0.0
    %1728 = vmatprep.subr.mxu0 0.0
    %1729 = vmatpush2.msra.mxu0 0.0
    %1730 = vmatprep.mubr.f32.mxu0 0.0
    %1731 = vmatmul.mubr.f32.gmra.mxu0 %v1590
    %v1732 = vpop.f32.mrf.mxu0
    %v1733 = vadd.f32 0.0, %v1732
    %v1734 = vpop.f32.mrf.mxu0
    %1735 = vdwg.mxu0
    %v1736 = vadd.f32 %v1592, %v1662
    %v1737 = vxor.u32 %v1736, 2147483648
    %v1738 = vmul.f32 %v1737, 1.442695
    %v1739 = vpow.pop %v1738
    %v1740 = vadd.f32 %v1739, 1.0
    %v1741 = vrcp.pop %v1740
    %v1742 = vmul.f32 1.0, %v1741
    %v1743 = vadd.f32 %v1593, %v1664
    %v1744 = vxor.u32 %v1743, 2147483648
    %v1745 = vmul.f32 %v1744, 1.442695
    %v1746 = vpow.pop %v1745
    %v1747 = vadd.f32 %v1746, 1.0
    %v1748 = vrcp.pop %v1747
    %v1749 = vmul.f32 1.0, %v1748
    %v1750 = vadd.f32 %v1733, %v420
    %v1751 = vmul.f32 %v1742, %v1750
    %v1752 = vadd.f32 %v1594, %v1751
    %v1753 = vtanh.pop %v1752
    %v1754 = vsub.f32 1.0, %v1749
    %v1755 = vmul.f32 %v1754, %v1753
    %v1756 = vmul.f32 %v1749, %v1590
    %v1757 = vadd.f32 %v1755, %v1756
    %1758 = vst [vmem:[#allocation2] sm:$0xff] %v1757
    // Predicated region
    $region46: #{tpu_custom_call.1} parent=1 // pred_check
      %p1759 = pneg %p58
    $region47: #{tpu_custom_call.1} parent=1 // pred_check_branch
      %1761 = sbr.rel (%p1759) target = $region49
    $region48: #{tpu_custom_call.1} parent=1 // pred_region
      %v1762 = vld [vmem:[#allocation7] sm:$0xff]
      %v1763 = vld [vmem:[#allocation7 + $0x8] sm:$0xff]
      %v1764 = vld [vmem:[#allocation7 + $0x10] sm:$0xff]
      %v1765 = vld [vmem:[#allocation7 + $0x18] sm:$0xff]
      %v1766 = vld [vmem:[#allocation7 + $0x20] sm:$0xff]
      %v1767 = vld [vmem:[#allocation7 + $0x28] sm:$0xff]
      %v1768 = vld [vmem:[#allocation7 + $0x30] sm:$0xff]
      %v1769 = vld [vmem:[#allocation7 + $0x38] sm:$0xff]
      %v1770 = vld [vmem:[#allocation7 + $0x40] sm:$0xff]
      %v1771 = vld [vmem:[#allocation7 + $0x48] sm:$0xff]
      %v1772 = vld [vmem:[#allocation7 + $0x50] sm:$0xff]
      %v1773 = vld [vmem:[#allocation7 + $0x58] sm:$0xff]
      %v1774 = vld [vmem:[#allocation7 + $0x60] sm:$0xff]
      %v1775 = vld [vmem:[#allocation7 + $0x68] sm:$0xff]
      %v1776 = vld [vmem:[#allocation7 + $0x70] sm:$0xff]
      %v1777 = vld [vmem:[#allocation7 + $0x78] sm:$0xff]
      %v1778 = vld [vmem:[#allocation7 + $0x80] sm:$0xff]
      %v1779 = vld [vmem:[#allocation2] sm:$0xff]
      %v1780 = vld [vmem:[%s1] sm:$0xff]
      %v1781 = vld [vmem:[%s7] sm:$0x1]
      %v1783 = vlaneseq
      %v1784 = vshrl.u32 %v1783, 7
      %v1785 = vsub.s32 0, %v1784
      %v1786 = vrot.slane %v1781, %v1785
      %vm1788 = vcmask 64512
      %v1790 = vsel %vm1788, %v1780, 0
      %1792 = vmatprep.subr.mxu0 0.0
      %1793 = vmatpush1.msra.mxu0 %v1777
      %1794 = vmatprep.subr.mxu0 0.0
      %1795 = vmatpush1.msra.mxu0 %v1776
      %1796 = vmatprep.subr.mxu0 0.0
      %1797 = vmatpush1.msra.mxu0 %v1775
      %1798 = vmatprep.subr.mxu0 0.0
      %1799 = vmatpush1.msra.mxu0 %v1774
      %1800 = vmatprep.subr.mxu0 0.0
      %1801 = vmatpush1.msra.mxu0 %v1773
      %1802 = vmatprep.subr.mxu0 0.0
      %1803 = vmatpush1.msra.mxu0 %v1772
      %1804 = vmatprep.subr.mxu0 0.0
      %1805 = vmatpush1.msra.mxu0 %v1771
      %1806 = vmatprep.subr.mxu0 0.0
      %1807 = vmatpush1.msra.mxu0 %v1770
      %1808 = vmatprep.subr.mxu0 0.0
      %1809 = vmatpush1.msra.mxu0 %v1769
      %1810 = vmatprep.subr.mxu0 0.0
      %1811 = vmatpush1.msra.mxu0 %v1768
      %1812 = vmatprep.subr.mxu0 0.0
      %1813 = vmatpush1.msra.mxu0 %v1767
      %1814 = vmatprep.subr.mxu0 0.0
      %1815 = vmatpush1.msra.mxu0 %v1766
      %1816 = vmatprep.subr.mxu0 0.0
      %1817 = vmatpush1.msra.mxu0 %v1765
      %1818 = vmatprep.subr.mxu0 0.0
      %1819 = vmatpush1.msra.mxu0 %v1764
      %1820 = vmatprep.subr.mxu0 0.0
      %1821 = vmatpush1.msra.mxu0 %v1763
      %1822 = vmatprep.subr.mxu0 0.0
      %1823 = vmatpush1.msra.mxu0 %v1762
      %1824 = vmatprep.subr.mxu0 0.0
      %1825 = vmatpush2.msra.mxu0 0.0
      %1826 = vmatprep.subr.mxu0 0.0
      %1827 = vmatpush2.msra.mxu0 0.0
      %1828 = vmatprep.subr.mxu0 0.0
      %1829 = vmatpush2.msra.mxu0 0.0
      %1830 = vmatprep.subr.mxu0 0.0
      %1831 = vmatpush2.msra.mxu0 0.0
      %1832 = vmatprep.subr.mxu0 0.0
      %1833 = vmatpush2.msra.mxu0 0.0
      %1834 = vmatprep.subr.mxu0 0.0
      %1835 = vmatpush2.msra.mxu0 0.0
      %1836 = vmatprep.subr.mxu0 0.0
      %1837 = vmatpush2.msra.mxu0 0.0
      %1838 = vmatprep.subr.mxu0 0.0
      %1839 = vmatpush2.msra.mxu0 0.0
      %1840 = vmatprep.subr.mxu0 0.0
      %1841 = vmatpush2.msra.mxu0 0.0
      %1842 = vmatprep.subr.mxu0 0.0
      %1843 = vmatpush2.msra.mxu0 0.0
      %1844 = vmatprep.subr.mxu0 0.0
      %1845 = vmatpush2.msra.mxu0 0.0
      %1846 = vmatprep.subr.mxu0 0.0
      %1847 = vmatpush2.msra.mxu0 0.0
      %1848 = vmatprep.subr.mxu0 0.0
      %1849 = vmatpush2.msra.mxu0 0.0
      %1850 = vmatprep.subr.mxu0 0.0
      %1851 = vmatpush2.msra.mxu0 0.0
      %1852 = vmatprep.subr.mxu0 0.0
      %1853 = vmatpush2.msra.mxu0 0.0
      %1854 = vmatprep.subr.mxu0 0.0
      %1855 = vmatpush2.msra.mxu0 %v1778
      %1856 = vmatprep.mubr.f32.mxu0 %v1790
      %1857 = vmatmul.mubr.f32.gmra.mxu0 %v1779
      %v1858 = vpop.f32.mrf.mxu0
      %v1859 = vadd.f32 %v1786, %v1858
      %v1860 = vpop.f32.mrf.mxu0
      %1861 = vdwg.mxu0
      %1862 = vst [vmem:[#allocation9] sm:$0xff] %v1859
    $region49: #{tpu_custom_call.1} parent=1 // pred_fallthru
      _
    // Predicated region
    $region50: #{tpu_custom_call.1} parent=1 // pred_check
      _
    $region51: #{tpu_custom_call.1} parent=1 // pred_check_branch
      %1864 = sbr.rel (0) target = $region53
    $region52: #{tpu_custom_call.1} parent=1 // pred_region
      %s1866 = ssub.s32 128, 128
      %1867 = vsyncadd [#allocation6], %s1866
      %s1869 = sshll.u32 [#allocation9], 4
      %s1870 = int_to_ptr.vmem [resolvable:$true] %s1869
      %1872 = dma.vmem_to_hbm [thread:$0]  %s1870, 128, %s8, [#allocation6]
    $region53: #{tpu_custom_call.1} parent=1 // pred_fallthru
      _
    // Predicated region
    $region54: #{tpu_custom_call.1} parent=1 // pred_check
      _
    $region55: #{tpu_custom_call.1} parent=1 // pred_check_branch
      %1874 = sbr.rel (0) target = $region57
    $region56: #{tpu_custom_call.1} parent=1 // pred_region
      %1875 = dma.done [#allocation6], 128
    $region57: #{tpu_custom_call.1} parent=1 // pred_fallthru
      _
    %1876 = vsyncpa [#allocation5], 1
    %1877 = vsyncpa [#allocation8], 1
    %1878 = vsyncpa [#allocation6], 1

</llo_original>
